<compile_context>
chip_gen: v6e
topology: v6e:2x2x1
jax: 0.10.0
libtpu: 0.0.40
codegen_flags: <defaults>
</compile_context>

<pallas_src>
import jax
import jax.numpy as jnp
from jax import lax
from jax.experimental import pallas as pl
from jax.experimental.pallas import tpu as pltpu


def gru_encoder_kernel(ids_ref,      # VMEM (seq_len, 1) int32 token ids
                       eproj_ref,    # VMEM (word_num, 3*GP)  fused emb+input proj (+folded biases)
                       w_hh_ref,     # VMEM (GP, 3*GP)        gate-aligned, pre-transposed W_hh
                       b_hn_ref,     # VMEM (1, GP)           n-gate hidden bias (padded)
                       h0_ref,       # VMEM (1, GP)           initial hidden (padded)
                       out_ref,      # VMEM (seq_len, GP)     per-step hidden outputs (padded lanes = 0)
                       h_final_ref): # VMEM (1, GP)           final hidden
    seq_len, gp3 = out_ref.shape[0], eproj_ref.shape[1]
    gp = gp3 // 3
    word_num = eproj_ref.shape[0]

    # ---- prologue (no time dependence, done once) --------------------------
    # Embedding lookup fused with the input projection: one one-hot MXU matmul
    # against the precomputed E_proj table.
    ids = ids_ref[...]                                                # (seq_len, 1)
    iota = lax.broadcasted_iota(jnp.int32, (seq_len, word_num), 1)
    onehot = (iota == ids).astype(jnp.float32)                        # (seq_len, word_num)
    gi_all = jnp.dot(onehot, eproj_ref[...],
                     preferred_element_type=jnp.float32)              # (seq_len, 3*GP)

    w_hh = w_hh_ref[...]          # (GP, 3*GP), resident in vregs
    b_hn = b_hn_ref[...]          # (1, GP)
    h = h0_ref[...]               # (1, GP)

    # ---- serial recurrence (fully unrolled, static slices => values in vregs)
    for t in range(seq_len):
        gi = gi_all[t:t + 1, :]                                       # (1, 3*GP) static slice
        gh = jnp.dot(h, w_hh, preferred_element_type=jnp.float32)     # (1, 3*GP), no bias add
        # Gate slices are whole 128-lane blocks (free re-views).
        r = jax.nn.sigmoid(gi[:, 0 * gp:1 * gp] + gh[:, 0 * gp:1 * gp])
        z = jax.nn.sigmoid(gi[:, 1 * gp:2 * gp] + gh[:, 1 * gp:2 * gp])
        n = jnp.tanh(gi[:, 2 * gp:3 * gp] + r * (gh[:, 2 * gp:3 * gp] + b_hn))
        h = n + z * (h - n)                                           # == (1-z)*n + z*h
        out_ref[pl.ds(t, 1), :] = h                                   # VMEM store; HBM writeback is one slab

    h_final_ref[...] = h


def rnn_encoder_forward(x_ids, emb_tbl, w_ih, w_hh, b_ih, b_hh, h0):
    """Pallas equivalent of RNNEncoder.forward(x, hidden).

    x_ids : (seq_len,) int32 token ids
    Returns (out, hidden) with PyTorch shapes:
      out    : (seq_len, 1, emb_dim)
      hidden : (n_layers=1, 1, emb_dim)
    """
    seq_len = x_ids.shape[0]
    word_num, H = emb_tbl.shape
    GP = ((H + 127) // 128) * 128          # gate lane-block width (>= 128, multiple of 128)

    f32 = jnp.float32
    w_ih = w_ih.astype(f32)
    w_hh = w_hh.astype(f32)
    b_ih = b_ih.astype(f32)
    b_hh = b_hh.astype(f32)
    emb_tbl = emb_tbl.astype(f32)

    # --- parameter-only precompute (fused embedding + input projection) -----
    # E_proj = emb_tbl @ W_ih^T + b_ih, with b_hh's r- and z-components folded
    # in (they are constant per step).  b_hh_n must stay inside r*(h_n+b_hh_n).
    eproj = emb_tbl @ w_ih.T + b_ih                                   # (word_num, 3H)
    eproj = eproj.at[:, 0:H].add(b_hh[0:H])
    eproj = eproj.at[:, H:2 * H].add(b_hh[H:2 * H])

    # --- gate-aligned zero-padded layouts (pad lanes MUST stay zero) --------
    eproj_pad = jnp.zeros((word_num, 3 * GP), f32)
    w_hh_t = w_hh.T                                                   # (H, 3H)
    w_hh_pad = jnp.zeros((GP, 3 * GP), f32)
    for g in range(3):
        eproj_pad = eproj_pad.at[:, g * GP:g * GP + H].set(eproj[:, g * H:(g + 1) * H])
        w_hh_pad = w_hh_pad.at[0:H, g * GP:g * GP + H].set(w_hh_t[:, g * H:(g + 1) * H])
    b_hn_pad = jnp.zeros((1, GP), f32).at[0, 0:H].set(b_hh[2 * H:3 * H])
    h0_pad = jnp.zeros((1, GP), f32).at[0, 0:H].set(h0.reshape(H).astype(f32))

    ids_2d = x_ids.astype(jnp.int32).reshape(seq_len, 1)

    vmem = pl.BlockSpec(memory_space=pltpu.MemorySpace.VMEM)

    out_pad, h_final_pad = pl.pallas_call(
        gru_encoder_kernel,
        out_shape=(
            jax.ShapeDtypeStruct((seq_len, GP), f32),
            jax.ShapeDtypeStruct((1, GP), f32),
        ),
        in_specs=[vmem] * 5,
        out_specs=(vmem, vmem),
        compiler_params=pltpu.CompilerParams(vmem_limit_bytes=32 * 1024 * 1024),
    )(ids_2d, eproj_pad, w_hh_pad, b_hn_pad, h0_pad)

    out = out_pad[:, :H].reshape(seq_len, 1, H)
    hidden = h_final_pad[:, :H].reshape(1, 1, H)
    return out, hidden


def _reference_forward(x_ids, emb_tbl, w_ih, w_hh, b_ih, b_hh, h0):
    """Pure-JAX reference of the PyTorch embedding + GRU semantics."""
    H = emb_tbl.shape[1]
    embs = emb_tbl[x_ids]                                  # (seq_len, H)

    def step(h, x_t):
        gi = x_t @ w_ih.T + b_ih
        gh = h @ w_hh.T + b_hh
        i_r, i_z, i_n = gi[0:H], gi[H:2 * H], gi[2 * H:3 * H]
        h_r, h_z, h_n = gh[0:H], gh[H:2 * H], gh[2 * H:3 * H]
        r = jax.nn.sigmoid(i_r + h_r)
        z = jax.nn.sigmoid(i_z + h_z)
        n = jnp.tanh(i_n + r * h_n)
        h_new = (1.0 - z) * n + z * h
        return h_new, h_new

    h_last, outs = jax.lax.scan(step, h0.reshape(H), embs)
    return outs.reshape(-1, 1, H), h_last.reshape(1, 1, H)


if __name__ == "__main__":
    # Small shapes consistent with the module: emb_dim=32, word_num=50, seq_len=8, batch=1.
    emb_dim = 32
    word_num = 50
    seq_len = 8
    n_layers = 1

    key = jax.random.PRNGKey(0)
    k_emb, k_wi, k_wh, k_bi, k_bh, k_x = jax.random.split(key, 6)

    # Deterministic parameter init (PyTorch-style ranges).
    emb_tbl = jax.random.normal(k_emb, (word_num, emb_dim), dtype=jnp.float32)
    bound = 1.0 / jnp.sqrt(emb_dim)
    w_ih = jax.random.uniform(k_wi, (3 * emb_dim, emb_dim), jnp.float32, -bound, bound)
    w_hh = jax.random.uniform(k_wh, (3 * emb_dim, emb_dim), jnp.float32, -bound, bound)
    b_ih = jax.random.uniform(k_bi, (3 * emb_dim,), jnp.float32, -bound, bound)
    b_hh = jax.random.uniform(k_bh, (3 * emb_dim,), jnp.float32, -bound, bound)

    # Inputs: token ids and init_hidden() zeros.
    x_ids = jax.random.randint(k_x, (seq_len,), 0, word_num, dtype=jnp.int32)
    h0 = jnp.zeros((n_layers, 1, emb_dim), dtype=jnp.float32)

    out, hidden = rnn_encoder_forward(x_ids, emb_tbl, w_ih, w_hh, b_ih, b_hh, h0)
    out, hidden = jax.block_until_ready((out, hidden))

    # Verify against a pure-JAX reference of the PyTorch semantics.
    out_ref, hidden_ref = _reference_forward(x_ids, emb_tbl, w_ih, w_hh, b_ih, b_hh, h0)
    assert out.shape == (seq_len, 1, emb_dim)
    assert hidden.shape == (n_layers, 1, emb_dim)
    assert jnp.allclose(out, out_ref, atol=1e-5, rtol=1e-5)
    assert jnp.allclose(hidden, hidden_ref, atol=1e-5, rtol=1e-5)

    print("KERNEL_OK")
</pallas_src>

<mosaic_0001>
module attributes {stable_mosaic.version = 11 : i64} {
  func.func @gru_encoder_kernel(%arg0: memref<8x1xi32, #tpu.memory_space<vmem>>, %arg1: memref<50x384xf32, #tpu.memory_space<vmem>>, %arg2: memref<128x384xf32, #tpu.memory_space<vmem>>, %arg3: memref<1x128xf32, #tpu.memory_space<vmem>>, %arg4: memref<1x128xf32, #tpu.memory_space<vmem>>, %arg5: memref<8x128xf32, #tpu.memory_space<vmem>>, %arg6: memref<1x128xf32, #tpu.memory_space<vmem>>) attributes {dimension_semantics = [], scalar_prefetch = 0 : i64, scratch_operands = 0 : i64, tpu.core_type = #tpu.core_type<tc>} {
    %c0 = arith.constant 0 : index
    %c0_0 = arith.constant 0 : index
    %0 = vector.load %arg0[%c0, %c0_0] : memref<8x1xi32, #tpu.memory_space<vmem>>, vector<8x1xi32>
    %1 = tpu.iota {dimensions = array<i32: 1>} : vector<8x50xi32>
    %2 = vector.broadcast %0 : vector<8x1xi32> to vector<8x50xi32>
    %3 = arith.cmpi eq, %1, %2 : vector<8x50xi32>
    %4 = arith.extui %3 : vector<8x50xi1> to vector<8x50xi32>
    %5 = arith.sitofp %4 : vector<8x50xi32> to vector<8x50xf32>
    %c0_1 = arith.constant 0 : index
    %c0_2 = arith.constant 0 : index
    %6 = vector.load %arg1[%c0_1, %c0_2] : memref<50x384xf32, #tpu.memory_space<vmem>>, vector<50x384xf32>
    %cst = arith.constant dense<0.000000e+00> : vector<8x384xf32>
    %7 = tpu.matmul %5, %6, %cst {dimension_numbers = #tpu.dot_dimension_numbers<[1], [0], [0], [1], [0, 0, 1, 1], [], []>} : vector<8x50xf32>, vector<50x384xf32>, vector<8x384xf32> -> vector<8x384xf32>
    %c0_3 = arith.constant 0 : index
    %c0_4 = arith.constant 0 : index
    %8 = vector.load %arg2[%c0_3, %c0_4] : memref<128x384xf32, #tpu.memory_space<vmem>>, vector<128x384xf32>
    %c0_5 = arith.constant 0 : index
    %c0_6 = arith.constant 0 : index
    %9 = vector.load %arg3[%c0_5, %c0_6] : memref<1x128xf32, #tpu.memory_space<vmem>>, vector<1x128xf32>
    %c0_7 = arith.constant 0 : index
    %c0_8 = arith.constant 0 : index
    %10 = vector.load %arg4[%c0_7, %c0_8] : memref<1x128xf32, #tpu.memory_space<vmem>>, vector<1x128xf32>
    %11 = vector.extract_strided_slice %7 {offsets = [0, 0], sizes = [1, 384], strides = [1, 1]} : vector<8x384xf32> to vector<1x384xf32>
    %cst_9 = arith.constant dense<0.000000e+00> : vector<1x384xf32>
    %12 = tpu.matmul %10, %8, %cst_9 {dimension_numbers = #tpu.dot_dimension_numbers<[1], [0], [0], [1], [0, 0, 1, 1], [], []>} : vector<1x128xf32>, vector<128x384xf32>, vector<1x384xf32> -> vector<1x384xf32>
    %13 = vector.extract_strided_slice %11 {offsets = [0, 0], sizes = [1, 128], strides = [1, 1]} : vector<1x384xf32> to vector<1x128xf32>
    %14 = vector.extract_strided_slice %12 {offsets = [0, 0], sizes = [1, 128], strides = [1, 1]} : vector<1x384xf32> to vector<1x128xf32>
    %15 = arith.addf %13, %14 : vector<1x128xf32>
    %16 = arith.negf %15 : vector<1x128xf32>
    %17 = math.exp %16 : vector<1x128xf32>
    %cst_10 = arith.constant 1.000000e+00 : f32
    %18 = vector.broadcast %cst_10 : f32 to vector<1x128xf32>
    %19 = arith.addf %18, %17 : vector<1x128xf32>
    %20 = arith.divf %18, %19 : vector<1x128xf32>
    %21 = vector.extract_strided_slice %11 {offsets = [0, 128], sizes = [1, 128], strides = [1, 1]} : vector<1x384xf32> to vector<1x128xf32>
    %22 = vector.extract_strided_slice %12 {offsets = [0, 128], sizes = [1, 128], strides = [1, 1]} : vector<1x384xf32> to vector<1x128xf32>
    %23 = arith.addf %21, %22 : vector<1x128xf32>
    %24 = arith.negf %23 : vector<1x128xf32>
    %25 = math.exp %24 : vector<1x128xf32>
    %cst_11 = arith.constant 1.000000e+00 : f32
    %26 = vector.broadcast %cst_11 : f32 to vector<1x128xf32>
    %27 = arith.addf %26, %25 : vector<1x128xf32>
    %28 = arith.divf %26, %27 : vector<1x128xf32>
    %29 = vector.extract_strided_slice %11 {offsets = [0, 256], sizes = [1, 128], strides = [1, 1]} : vector<1x384xf32> to vector<1x128xf32>
    %30 = vector.extract_strided_slice %12 {offsets = [0, 256], sizes = [1, 128], strides = [1, 1]} : vector<1x384xf32> to vector<1x128xf32>
    %31 = arith.addf %30, %9 : vector<1x128xf32>
    %32 = arith.mulf %20, %31 : vector<1x128xf32>
    %33 = arith.addf %29, %32 : vector<1x128xf32>
    %34 = math.tanh %33 : vector<1x128xf32>
    %35 = arith.subf %10, %34 : vector<1x128xf32>
    %36 = arith.mulf %28, %35 : vector<1x128xf32>
    %37 = arith.addf %34, %36 : vector<1x128xf32>
    %c0_12 = arith.constant 0 : index
    %c0_13 = arith.constant 0 : index
    %38 = vector.load %arg5[%c0_12, %c0_13] : memref<8x128xf32, #tpu.memory_space<vmem>>, vector<1x128xf32>
    tpu.vector_store %arg5[%c0_12, %c0_13], %37 {strides = array<i32>} : memref<8x128xf32, #tpu.memory_space<vmem>>, vector<1x128xf32>,
    %39 = vector.extract_strided_slice %7 {offsets = [1, 0], sizes = [1, 384], strides = [1, 1]} : vector<8x384xf32> to vector<1x384xf32>
    %cst_14 = arith.constant dense<0.000000e+00> : vector<1x384xf32>
    %40 = tpu.matmul %37, %8, %cst_14 {dimension_numbers = #tpu.dot_dimension_numbers<[1], [0], [0], [1], [0, 0, 1, 1], [], []>} : vector<1x128xf32>, vector<128x384xf32>, vector<1x384xf32> -> vector<1x384xf32>
    %41 = vector.extract_strided_slice %39 {offsets = [0, 0], sizes = [1, 128], strides = [1, 1]} : vector<1x384xf32> to vector<1x128xf32>
    %42 = vector.extract_strided_slice %40 {offsets = [0, 0], sizes = [1, 128], strides = [1, 1]} : vector<1x384xf32> to vector<1x128xf32>
    %43 = arith.addf %41, %42 : vector<1x128xf32>
    %44 = arith.negf %43 : vector<1x128xf32>
    %45 = math.exp %44 : vector<1x128xf32>
    %cst_15 = arith.constant 1.000000e+00 : f32
    %46 = vector.broadcast %cst_15 : f32 to vector<1x128xf32>
    %47 = arith.addf %46, %45 : vector<1x128xf32>
    %48 = arith.divf %46, %47 : vector<1x128xf32>
    %49 = vector.extract_strided_slice %39 {offsets = [0, 128], sizes = [1, 128], strides = [1, 1]} : vector<1x384xf32> to vector<1x128xf32>
    %50 = vector.extract_strided_slice %40 {offsets = [0, 128], sizes = [1, 128], strides = [1, 1]} : vector<1x384xf32> to vector<1x128xf32>
    %51 = arith.addf %49, %50 : vector<1x128xf32>
    %52 = arith.negf %51 : vector<1x128xf32>
    %53 = math.exp %52 : vector<1x128xf32>
    %cst_16 = arith.constant 1.000000e+00 : f32
    %54 = vector.broadcast %cst_16 : f32 to vector<1x128xf32>
    %55 = arith.addf %54, %53 : vector<1x128xf32>
    %56 = arith.divf %54, %55 : vector<1x128xf32>
    %57 = vector.extract_strided_slice %39 {offsets = [0, 256], sizes = [1, 128], strides = [1, 1]} : vector<1x384xf32> to vector<1x128xf32>
    %58 = vector.extract_strided_slice %40 {offsets = [0, 256], sizes = [1, 128], strides = [1, 1]} : vector<1x384xf32> to vector<1x128xf32>
    %59 = arith.addf %58, %9 : vector<1x128xf32>
    %60 = arith.mulf %48, %59 : vector<1x128xf32>
    %61 = arith.addf %57, %60 : vector<1x128xf32>
    %62 = math.tanh %61 : vector<1x128xf32>
    %63 = arith.subf %37, %62 : vector<1x128xf32>
    %64 = arith.mulf %56, %63 : vector<1x128xf32>
    %65 = arith.addf %62, %64 : vector<1x128xf32>
    %c1 = arith.constant 1 : index
    %c0_17 = arith.constant 0 : index
    %66 = vector.load %arg5[%c1, %c0_17] : memref<8x128xf32, #tpu.memory_space<vmem>>, vector<1x128xf32>
    tpu.vector_store %arg5[%c1, %c0_17], %65 {strides = array<i32>} : memref<8x128xf32, #tpu.memory_space<vmem>>, vector<1x128xf32>,
    %67 = vector.extract_strided_slice %7 {offsets = [2, 0], sizes = [1, 384], strides = [1, 1]} : vector<8x384xf32> to vector<1x384xf32>
    %cst_18 = arith.constant dense<0.000000e+00> : vector<1x384xf32>
    %68 = tpu.matmul %65, %8, %cst_18 {dimension_numbers = #tpu.dot_dimension_numbers<[1], [0], [0], [1], [0, 0, 1, 1], [], []>} : vector<1x128xf32>, vector<128x384xf32>, vector<1x384xf32> -> vector<1x384xf32>
    %69 = vector.extract_strided_slice %67 {offsets = [0, 0], sizes = [1, 128], strides = [1, 1]} : vector<1x384xf32> to vector<1x128xf32>
    %70 = vector.extract_strided_slice %68 {offsets = [0, 0], sizes = [1, 128], strides = [1, 1]} : vector<1x384xf32> to vector<1x128xf32>
    %71 = arith.addf %69, %70 : vector<1x128xf32>
    %72 = arith.negf %71 : vector<1x128xf32>
    %73 = math.exp %72 : vector<1x128xf32>
    %cst_19 = arith.constant 1.000000e+00 : f32
    %74 = vector.broadcast %cst_19 : f32 to vector<1x128xf32>
    %75 = arith.addf %74, %73 : vector<1x128xf32>
    %76 = arith.divf %74, %75 : vector<1x128xf32>
    %77 = vector.extract_strided_slice %67 {offsets = [0, 128], sizes = [1, 128], strides = [1, 1]} : vector<1x384xf32> to vector<1x128xf32>
    %78 = vector.extract_strided_slice %68 {offsets = [0, 128], sizes = [1, 128], strides = [1, 1]} : vector<1x384xf32> to vector<1x128xf32>
    %79 = arith.addf %77, %78 : vector<1x128xf32>
    %80 = arith.negf %79 : vector<1x128xf32>
    %81 = math.exp %80 : vector<1x128xf32>
    %cst_20 = arith.constant 1.000000e+00 : f32
    %82 = vector.broadcast %cst_20 : f32 to vector<1x128xf32>
    %83 = arith.addf %82, %81 : vector<1x128xf32>
    %84 = arith.divf %82, %83 : vector<1x128xf32>
    %85 = vector.extract_strided_slice %67 {offsets = [0, 256], sizes = [1, 128], strides = [1, 1]} : vector<1x384xf32> to vector<1x128xf32>
    %86 = vector.extract_strided_slice %68 {offsets = [0, 256], sizes = [1, 128], strides = [1, 1]} : vector<1x384xf32> to vector<1x128xf32>
    %87 = arith.addf %86, %9 : vector<1x128xf32>
    %88 = arith.mulf %76, %87 : vector<1x128xf32>
    %89 = arith.addf %85, %88 : vector<1x128xf32>
    %90 = math.tanh %89 : vector<1x128xf32>
    %91 = arith.subf %65, %90 : vector<1x128xf32>
    %92 = arith.mulf %84, %91 : vector<1x128xf32>
    %93 = arith.addf %90, %92 : vector<1x128xf32>
    %c2 = arith.constant 2 : index
    %c0_21 = arith.constant 0 : index
    %94 = vector.load %arg5[%c2, %c0_21] : memref<8x128xf32, #tpu.memory_space<vmem>>, vector<1x128xf32>
    tpu.vector_store %arg5[%c2, %c0_21], %93 {strides = array<i32>} : memref<8x128xf32, #tpu.memory_space<vmem>>, vector<1x128xf32>,
    %95 = vector.extract_strided_slice %7 {offsets = [3, 0], sizes = [1, 384], strides = [1, 1]} : vector<8x384xf32> to vector<1x384xf32>
    %cst_22 = arith.constant dense<0.000000e+00> : vector<1x384xf32>
    %96 = tpu.matmul %93, %8, %cst_22 {dimension_numbers = #tpu.dot_dimension_numbers<[1], [0], [0], [1], [0, 0, 1, 1], [], []>} : vector<1x128xf32>, vector<128x384xf32>, vector<1x384xf32> -> vector<1x384xf32>
    %97 = vector.extract_strided_slice %95 {offsets = [0, 0], sizes = [1, 128], strides = [1, 1]} : vector<1x384xf32> to vector<1x128xf32>
    %98 = vector.extract_strided_slice %96 {offsets = [0, 0], sizes = [1, 128], strides = [1, 1]} : vector<1x384xf32> to vector<1x128xf32>
    %99 = arith.addf %97, %98 : vector<1x128xf32>
    %100 = arith.negf %99 : vector<1x128xf32>
    %101 = math.exp %100 : vector<1x128xf32>
    %cst_23 = arith.constant 1.000000e+00 : f32
    %102 = vector.broadcast %cst_23 : f32 to vector<1x128xf32>
    %103 = arith.addf %102, %101 : vector<1x128xf32>
    %104 = arith.divf %102, %103 : vector<1x128xf32>
    %105 = vector.extract_strided_slice %95 {offsets = [0, 128], sizes = [1, 128], strides = [1, 1]} : vector<1x384xf32> to vector<1x128xf32>
    %106 = vector.extract_strided_slice %96 {offsets = [0, 128], sizes = [1, 128], strides = [1, 1]} : vector<1x384xf32> to vector<1x128xf32>
    %107 = arith.addf %105, %106 : vector<1x128xf32>
    %108 = arith.negf %107 : vector<1x128xf32>
    %109 = math.exp %108 : vector<1x128xf32>
    %cst_24 = arith.constant 1.000000e+00 : f32
    %110 = vector.broadcast %cst_24 : f32 to vector<1x128xf32>
    %111 = arith.addf %110, %109 : vector<1x128xf32>
    %112 = arith.divf %110, %111 : vector<1x128xf32>
    %113 = vector.extract_strided_slice %95 {offsets = [0, 256], sizes = [1, 128], strides = [1, 1]} : vector<1x384xf32> to vector<1x128xf32>
    %114 = vector.extract_strided_slice %96 {offsets = [0, 256], sizes = [1, 128], strides = [1, 1]} : vector<1x384xf32> to vector<1x128xf32>
    %115 = arith.addf %114, %9 : vector<1x128xf32>
    %116 = arith.mulf %104, %115 : vector<1x128xf32>
    %117 = arith.addf %113, %116 : vector<1x128xf32>
    %118 = math.tanh %117 : vector<1x128xf32>
    %119 = arith.subf %93, %118 : vector<1x128xf32>
    %120 = arith.mulf %112, %119 : vector<1x128xf32>
    %121 = arith.addf %118, %120 : vector<1x128xf32>
    %c3 = arith.constant 3 : index
    %c0_25 = arith.constant 0 : index
    %122 = vector.load %arg5[%c3, %c0_25] : memref<8x128xf32, #tpu.memory_space<vmem>>, vector<1x128xf32>
    tpu.vector_store %arg5[%c3, %c0_25], %121 {strides = array<i32>} : memref<8x128xf32, #tpu.memory_space<vmem>>, vector<1x128xf32>,
    %123 = vector.extract_strided_slice %7 {offsets = [4, 0], sizes = [1, 384], strides = [1, 1]} : vector<8x384xf32> to vector<1x384xf32>
    %cst_26 = arith.constant dense<0.000000e+00> : vector<1x384xf32>
    %124 = tpu.matmul %121, %8, %cst_26 {dimension_numbers = #tpu.dot_dimension_numbers<[1], [0], [0], [1], [0, 0, 1, 1], [], []>} : vector<1x128xf32>, vector<128x384xf32>, vector<1x384xf32> -> vector<1x384xf32>
    %125 = vector.extract_strided_slice %123 {offsets = [0, 0], sizes = [1, 128], strides = [1, 1]} : vector<1x384xf32> to vector<1x128xf32>
    %126 = vector.extract_strided_slice %124 {offsets = [0, 0], sizes = [1, 128], strides = [1, 1]} : vector<1x384xf32> to vector<1x128xf32>
    %127 = arith.addf %125, %126 : vector<1x128xf32>
    %128 = arith.negf %127 : vector<1x128xf32>
    %129 = math.exp %128 : vector<1x128xf32>
    %cst_27 = arith.constant 1.000000e+00 : f32
    %130 = vector.broadcast %cst_27 : f32 to vector<1x128xf32>
    %131 = arith.addf %130, %129 : vector<1x128xf32>
    %132 = arith.divf %130, %131 : vector<1x128xf32>
    %133 = vector.extract_strided_slice %123 {offsets = [0, 128], sizes = [1, 128], strides = [1, 1]} : vector<1x384xf32> to vector<1x128xf32>
    %134 = vector.extract_strided_slice %124 {offsets = [0, 128], sizes = [1, 128], strides = [1, 1]} : vector<1x384xf32> to vector<1x128xf32>
    %135 = arith.addf %133, %134 : vector<1x128xf32>
    %136 = arith.negf %135 : vector<1x128xf32>
    %137 = math.exp %136 : vector<1x128xf32>
    %cst_28 = arith.constant 1.000000e+00 : f32
    %138 = vector.broadcast %cst_28 : f32 to vector<1x128xf32>
    %139 = arith.addf %138, %137 : vector<1x128xf32>
    %140 = arith.divf %138, %139 : vector<1x128xf32>
    %141 = vector.extract_strided_slice %123 {offsets = [0, 256], sizes = [1, 128], strides = [1, 1]} : vector<1x384xf32> to vector<1x128xf32>
    %142 = vector.extract_strided_slice %124 {offsets = [0, 256], sizes = [1, 128], strides = [1, 1]} : vector<1x384xf32> to vector<1x128xf32>
    %143 = arith.addf %142, %9 : vector<1x128xf32>
    %144 = arith.mulf %132, %143 : vector<1x128xf32>
    %145 = arith.addf %141, %144 : vector<1x128xf32>
    %146 = math.tanh %145 : vector<1x128xf32>
    %147 = arith.subf %121, %146 : vector<1x128xf32>
    %148 = arith.mulf %140, %147 : vector<1x128xf32>
    %149 = arith.addf %146, %148 : vector<1x128xf32>
    %c4 = arith.constant 4 : index
    %c0_29 = arith.constant 0 : index
    %150 = vector.load %arg5[%c4, %c0_29] : memref<8x128xf32, #tpu.memory_space<vmem>>, vector<1x128xf32>
    tpu.vector_store %arg5[%c4, %c0_29], %149 {strides = array<i32>} : memref<8x128xf32, #tpu.memory_space<vmem>>, vector<1x128xf32>,
    %151 = vector.extract_strided_slice %7 {offsets = [5, 0], sizes = [1, 384], strides = [1, 1]} : vector<8x384xf32> to vector<1x384xf32>
    %cst_30 = arith.constant dense<0.000000e+00> : vector<1x384xf32>
    %152 = tpu.matmul %149, %8, %cst_30 {dimension_numbers = #tpu.dot_dimension_numbers<[1], [0], [0], [1], [0, 0, 1, 1], [], []>} : vector<1x128xf32>, vector<128x384xf32>, vector<1x384xf32> -> vector<1x384xf32>
    %153 = vector.extract_strided_slice %151 {offsets = [0, 0], sizes = [1, 128], strides = [1, 1]} : vector<1x384xf32> to vector<1x128xf32>
    %154 = vector.extract_strided_slice %152 {offsets = [0, 0], sizes = [1, 128], strides = [1, 1]} : vector<1x384xf32> to vector<1x128xf32>
    %155 = arith.addf %153, %154 : vector<1x128xf32>
    %156 = arith.negf %155 : vector<1x128xf32>
    %157 = math.exp %156 : vector<1x128xf32>
    %cst_31 = arith.constant 1.000000e+00 : f32
    %158 = vector.broadcast %cst_31 : f32 to vector<1x128xf32>
    %159 = arith.addf %158, %157 : vector<1x128xf32>
    %160 = arith.divf %158, %159 : vector<1x128xf32>
    %161 = vector.extract_strided_slice %151 {offsets = [0, 128], sizes = [1, 128], strides = [1, 1]} : vector<1x384xf32> to vector<1x128xf32>
    %162 = vector.extract_strided_slice %152 {offsets = [0, 128], sizes = [1, 128], strides = [1, 1]} : vector<1x384xf32> to vector<1x128xf32>
    %163 = arith.addf %161, %162 : vector<1x128xf32>
    %164 = arith.negf %163 : vector<1x128xf32>
    %165 = math.exp %164 : vector<1x128xf32>
    %cst_32 = arith.constant 1.000000e+00 : f32
    %166 = vector.broadcast %cst_32 : f32 to vector<1x128xf32>
    %167 = arith.addf %166, %165 : vector<1x128xf32>
    %168 = arith.divf %166, %167 : vector<1x128xf32>
    %169 = vector.extract_strided_slice %151 {offsets = [0, 256], sizes = [1, 128], strides = [1, 1]} : vector<1x384xf32> to vector<1x128xf32>
    %170 = vector.extract_strided_slice %152 {offsets = [0, 256], sizes = [1, 128], strides = [1, 1]} : vector<1x384xf32> to vector<1x128xf32>
    %171 = arith.addf %170, %9 : vector<1x128xf32>
    %172 = arith.mulf %160, %171 : vector<1x128xf32>
    %173 = arith.addf %169, %172 : vector<1x128xf32>
    %174 = math.tanh %173 : vector<1x128xf32>
    %175 = arith.subf %149, %174 : vector<1x128xf32>
    %176 = arith.mulf %168, %175 : vector<1x128xf32>
    %177 = arith.addf %174, %176 : vector<1x128xf32>
    %c5 = arith.constant 5 : index
    %c0_33 = arith.constant 0 : index
    %178 = vector.load %arg5[%c5, %c0_33] : memref<8x128xf32, #tpu.memory_space<vmem>>, vector<1x128xf32>
    tpu.vector_store %arg5[%c5, %c0_33], %177 {strides = array<i32>} : memref<8x128xf32, #tpu.memory_space<vmem>>, vector<1x128xf32>,
    %179 = vector.extract_strided_slice %7 {offsets = [6, 0], sizes = [1, 384], strides = [1, 1]} : vector<8x384xf32> to vector<1x384xf32>
    %cst_34 = arith.constant dense<0.000000e+00> : vector<1x384xf32>
    %180 = tpu.matmul %177, %8, %cst_34 {dimension_numbers = #tpu.dot_dimension_numbers<[1], [0], [0], [1], [0, 0, 1, 1], [], []>} : vector<1x128xf32>, vector<128x384xf32>, vector<1x384xf32> -> vector<1x384xf32>
    %181 = vector.extract_strided_slice %179 {offsets = [0, 0], sizes = [1, 128], strides = [1, 1]} : vector<1x384xf32> to vector<1x128xf32>
    %182 = vector.extract_strided_slice %180 {offsets = [0, 0], sizes = [1, 128], strides = [1, 1]} : vector<1x384xf32> to vector<1x128xf32>
    %183 = arith.addf %181, %182 : vector<1x128xf32>
    %184 = arith.negf %183 : vector<1x128xf32>
    %185 = math.exp %184 : vector<1x128xf32>
    %cst_35 = arith.constant 1.000000e+00 : f32
    %186 = vector.broadcast %cst_35 : f32 to vector<1x128xf32>
    %187 = arith.addf %186, %185 : vector<1x128xf32>
    %188 = arith.divf %186, %187 : vector<1x128xf32>
    %189 = vector.extract_strided_slice %179 {offsets = [0, 128], sizes = [1, 128], strides = [1, 1]} : vector<1x384xf32> to vector<1x128xf32>
    %190 = vector.extract_strided_slice %180 {offsets = [0, 128], sizes = [1, 128], strides = [1, 1]} : vector<1x384xf32> to vector<1x128xf32>
    %191 = arith.addf %189, %190 : vector<1x128xf32>
    %192 = arith.negf %191 : vector<1x128xf32>
    %193 = math.exp %192 : vector<1x128xf32>
    %cst_36 = arith.constant 1.000000e+00 : f32
    %194 = vector.broadcast %cst_36 : f32 to vector<1x128xf32>
    %195 = arith.addf %194, %193 : vector<1x128xf32>
    %196 = arith.divf %194, %195 : vector<1x128xf32>
    %197 = vector.extract_strided_slice %179 {offsets = [0, 256], sizes = [1, 128], strides = [1, 1]} : vector<1x384xf32> to vector<1x128xf32>
    %198 = vector.extract_strided_slice %180 {offsets = [0, 256], sizes = [1, 128], strides = [1, 1]} : vector<1x384xf32> to vector<1x128xf32>
    %199 = arith.addf %198, %9 : vector<1x128xf32>
    %200 = arith.mulf %188, %199 : vector<1x128xf32>
    %201 = arith.addf %197, %200 : vector<1x128xf32>
    %202 = math.tanh %201 : vector<1x128xf32>
    %203 = arith.subf %177, %202 : vector<1x128xf32>
    %204 = arith.mulf %196, %203 : vector<1x128xf32>
    %205 = arith.addf %202, %204 : vector<1x128xf32>
    %c6 = arith.constant 6 : index
    %c0_37 = arith.constant 0 : index
    %206 = vector.load %arg5[%c6, %c0_37] : memref<8x128xf32, #tpu.memory_space<vmem>>, vector<1x128xf32>
    tpu.vector_store %arg5[%c6, %c0_37], %205 {strides = array<i32>} : memref<8x128xf32, #tpu.memory_space<vmem>>, vector<1x128xf32>,
    %207 = vector.extract_strided_slice %7 {offsets = [7, 0], sizes = [1, 384], strides = [1, 1]} : vector<8x384xf32> to vector<1x384xf32>
    %cst_38 = arith.constant dense<0.000000e+00> : vector<1x384xf32>
    %208 = tpu.matmul %205, %8, %cst_38 {dimension_numbers = #tpu.dot_dimension_numbers<[1], [0], [0], [1], [0, 0, 1, 1], [], []>} : vector<1x128xf32>, vector<128x384xf32>, vector<1x384xf32> -> vector<1x384xf32>
    %209 = vector.extract_strided_slice %207 {offsets = [0, 0], sizes = [1, 128], strides = [1, 1]} : vector<1x384xf32> to vector<1x128xf32>
    %210 = vector.extract_strided_slice %208 {offsets = [0, 0], sizes = [1, 128], strides = [1, 1]} : vector<1x384xf32> to vector<1x128xf32>
    %211 = arith.addf %209, %210 : vector<1x128xf32>
    %212 = arith.negf %211 : vector<1x128xf32>
    %213 = math.exp %212 : vector<1x128xf32>
    %cst_39 = arith.constant 1.000000e+00 : f32
    %214 = vector.broadcast %cst_39 : f32 to vector<1x128xf32>
    %215 = arith.addf %214, %213 : vector<1x128xf32>
    %216 = arith.divf %214, %215 : vector<1x128xf32>
    %217 = vector.extract_strided_slice %207 {offsets = [0, 128], sizes = [1, 128], strides = [1, 1]} : vector<1x384xf32> to vector<1x128xf32>
    %218 = vector.extract_strided_slice %208 {offsets = [0, 128], sizes = [1, 128], strides = [1, 1]} : vector<1x384xf32> to vector<1x128xf32>
    %219 = arith.addf %217, %218 : vector<1x128xf32>
    %220 = arith.negf %219 : vector<1x128xf32>
    %221 = math.exp %220 : vector<1x128xf32>
    %cst_40 = arith.constant 1.000000e+00 : f32
    %222 = vector.broadcast %cst_40 : f32 to vector<1x128xf32>
    %223 = arith.addf %222, %221 : vector<1x128xf32>
    %224 = arith.divf %222, %223 : vector<1x128xf32>
    %225 = vector.extract_strided_slice %207 {offsets = [0, 256], sizes = [1, 128], strides = [1, 1]} : vector<1x384xf32> to vector<1x128xf32>
    %226 = vector.extract_strided_slice %208 {offsets = [0, 256], sizes = [1, 128], strides = [1, 1]} : vector<1x384xf32> to vector<1x128xf32>
    %227 = arith.addf %226, %9 : vector<1x128xf32>
    %228 = arith.mulf %216, %227 : vector<1x128xf32>
    %229 = arith.addf %225, %228 : vector<1x128xf32>
    %230 = math.tanh %229 : vector<1x128xf32>
    %231 = arith.subf %205, %230 : vector<1x128xf32>
    %232 = arith.mulf %224, %231 : vector<1x128xf32>
    %233 = arith.addf %230, %232 : vector<1x128xf32>
    %c7 = arith.constant 7 : index
    %c0_41 = arith.constant 0 : index
    %234 = vector.load %arg5[%c7, %c0_41] : memref<8x128xf32, #tpu.memory_space<vmem>>, vector<1x128xf32>
    tpu.vector_store %arg5[%c7, %c0_41], %233 {strides = array<i32>} : memref<8x128xf32, #tpu.memory_space<vmem>>, vector<1x128xf32>,
    %c0_42 = arith.constant 0 : index
    %c0_43 = arith.constant 0 : index
    %235 = vector.load %arg6[%c0_42, %c0_43] : memref<1x128xf32, #tpu.memory_space<vmem>>, vector<1x128xf32>
    tpu.vector_store %arg6[%c0_42, %c0_43], %233 {strides = array<i32>} : memref<1x128xf32, #tpu.memory_space<vmem>>, vector<1x128xf32>,
    return
  }
}

</mosaic_0001>

<llo_original>
// kernel: tpu_custom_call.1
$region0: #{tpu_custom_call.1}
  #allocation0 [shape = 'u32[]', space=smem, size = 0x4, offset = 0x4, fixed_abs, tag = 'smem constant byte address 0x4 - core index']
  #allocation1 [shape = 'u32[144,128]{1,0:T(1,128)}', space=vmem, size = 0x12000, scoped, tag = 'internal scratch']
  %s0 = inlined_call_operand.vmem [shape: s32[8,1], index: 0, kind: input, shape index: {}]
  %s1 = inlined_call_operand.hbm [shape: f32[50,384], index: 1, kind: input, shape index: {}]
  %s2 = inlined_call_operand.hbm [shape: f32[128,384], index: 2, kind: input, shape index: {}]
  %s3 = inlined_call_operand.vmem [shape: f32[1,128], index: 3, kind: input, shape index: {}]
  %s4 = inlined_call_operand.vmem [shape: f32[1,128], index: 4, kind: input, shape index: {}]
  %s5 = inlined_call_operand.hbm [shape: f32[8,128], index: 5, kind: output, shape index: {0}]
  %s6 = inlined_call_operand.hbm [shape: f32[1,128], index: 6, kind: output, shape index: {1}]
  %7 = xla_tuple %s5, %s6
  %s8 = sld [smem:[#allocation0]]
  $region46: #{tpu_custom_call.1} parent=0
    _
  %s10 = ssub.s32 1, %s8
  %s11 = scalar_select 0, %s10, %s8
  $region1: #{tpu_custom_call.1} parent=0
    #allocation2 [shape = 'u8[86016]{0}', space=vmem, size = 0x15000, scoped, tag = 'input window, operand 1, single buffered']
    #allocation3 [shape = 's32[1]{0}', space=sflag, size = 0x4, scoped, tag = 'scoped memory for tpu_custom_call.1']
    #allocation4 [shape = 's32[1]{0}', space=sflag, size = 0x4, scoped, tag = 'scoped memory for tpu_custom_call.1']
    #allocation5 [shape = 'u8[196608]{0}', space=vmem, size = 0x30000, scoped, tag = 'input window, operand 2, single buffered']
    #allocation6 [shape = 's32[1]{0}', space=sflag, size = 0x4, scoped, tag = 'scoped memory for tpu_custom_call.1']
    #allocation7 [shape = 'u8[4096]{0}', space=vmem, size = 0x1000, scoped, tag = 'output window, operand 0, single buffered']
    #allocation8 [shape = 'u8[512]{0}', space=vmem, size = 0x400, scoped, tag = 'output window, operand 1, single buffered']
    #allocation9 [shape = 's32[1]{0}', space=sflag, size = 0x4, scoped, tag = 'scoped memory for tpu_custom_call.1']
    %12 = vsyncpa [#allocation3], 0
    %13 = vsyncpa [#allocation6], 0
    %14 = vsyncpa [#allocation4], 0
    %15 = vsyncpa [#allocation9], 0
    // Predicated region
    $region2: #{tpu_custom_call.1} parent=1 // pred_check
      _
    $region3: #{tpu_custom_call.1} parent=1 // pred_check_branch
      %17 = sbr.rel (0) target = $region5
    $region4: #{tpu_custom_call.1} parent=1 // pred_region
      _
    $region5: #{tpu_custom_call.1} parent=1 // pred_fallthru
      _
    // Predicated region
    $region6: #{tpu_custom_call.1} parent=1 // pred_check
      _
    $region7: #{tpu_custom_call.1} parent=1 // pred_check_branch
      %19 = sbr.rel (0) target = $region9
    $region8: #{tpu_custom_call.1} parent=1 // pred_region
      %s21 = ssub.s32 2688, 2688
      %22 = vsyncadd [#allocation3], %s21
      %s23 = sshll.u32 [#allocation2], 4
      %s24 = int_to_ptr.vmem [resolvable:$true] %s23
      %29 = dma.hbm_to_vmem [thread:$0]  %s1, 2688, %s24, [#allocation3], 384, 384, 24
    $region9: #{tpu_custom_call.1} parent=1 // pred_fallthru
      _
    // Predicated region
    $region10: #{tpu_custom_call.1} parent=1 // pred_check
      _
    $region11: #{tpu_custom_call.1} parent=1 // pred_check_branch
      %31 = sbr.rel (0) target = $region13
    $region12: #{tpu_custom_call.1} parent=1 // pred_region
      %s33 = ssub.s32 6144, 6144
      %34 = vsyncadd [#allocation6], %s33
      %s35 = sshll.u32 [#allocation5], 4
      %s36 = int_to_ptr.vmem [resolvable:$true] %s35
      %41 = dma.hbm_to_vmem [thread:$0]  %s2, 6144, %s36, [#allocation6], 384, 384, 24
    $region13: #{tpu_custom_call.1} parent=1 // pred_fallthru
      _
    // Predicated region
    $region14: #{tpu_custom_call.1} parent=1 // pred_check
      _
    $region15: #{tpu_custom_call.1} parent=1 // pred_check_branch
      %43 = sbr.rel (0) target = $region17
    $region16: #{tpu_custom_call.1} parent=1 // pred_region
      _
    $region17: #{tpu_custom_call.1} parent=1 // pred_fallthru
      _
    // Predicated region
    $region18: #{tpu_custom_call.1} parent=1 // pred_check
      _
    $region19: #{tpu_custom_call.1} parent=1 // pred_check_branch
      %45 = sbr.rel (0) target = $region21
    $region20: #{tpu_custom_call.1} parent=1 // pred_region
      _
    $region21: #{tpu_custom_call.1} parent=1 // pred_fallthru
      _
    // Predicated region
    $region22: #{tpu_custom_call.1} parent=1 // pred_check
      _
    $region23: #{tpu_custom_call.1} parent=1 // pred_check_branch
      %47 = sbr.rel (0) target = $region25
    $region24: #{tpu_custom_call.1} parent=1 // pred_region
      %48 = dma.done [#allocation3], 2688
    $region25: #{tpu_custom_call.1} parent=1 // pred_fallthru
      _
    // Predicated region
    $region26: #{tpu_custom_call.1} parent=1 // pred_check
      _
    $region27: #{tpu_custom_call.1} parent=1 // pred_check_branch
      %50 = sbr.rel (0) target = $region29
    $region28: #{tpu_custom_call.1} parent=1 // pred_region
      %51 = dma.done [#allocation6], 6144
    $region29: #{tpu_custom_call.1} parent=1 // pred_fallthru
      _
    %v52 = vld [vmem:[%s0] sm:$0xff]
    %v53 = vlaneseq
    %v54 = vand.u32 %v53, 127
    %55 = vset.pattern.permute.xlu0 0
    %56 = vperm.xlu0 %55, %v52
    %v57 = vpop.permute.xlu0 %56
    %vm58 = vcmp.eq.s32.totalorder %v54, %v57
    %v59 = vsel %vm58, 1, 0
    %v60 = vcvt.s32.f32 %v59
    %v61 = vld [vmem:[#allocation2] sm:$0xff]
    %v62 = vld [vmem:[#allocation2 + $0x8] sm:$0xff]
    %v63 = vld [vmem:[#allocation2 + $0x10] sm:$0xff]
    %v64 = vld [vmem:[#allocation2 + $0x18] sm:$0xff]
    %v65 = vld [vmem:[#allocation2 + $0x20] sm:$0xff]
    %v66 = vld [vmem:[#allocation2 + $0x28] sm:$0xff]
    %v67 = vld [vmem:[#allocation2 + $0x30] sm:$0xff]
    %v68 = vld [vmem:[#allocation2 + $0x38] sm:$0xff]
    %v69 = vld [vmem:[#allocation2 + $0x40] sm:$0xff]
    %v70 = vld [vmem:[#allocation2 + $0x48] sm:$0xff]
    %v71 = vld [vmem:[#allocation2 + $0x50] sm:$0xff]
    %v72 = vld [vmem:[#allocation2 + $0x58] sm:$0xff]
    %v73 = vld [vmem:[#allocation2 + $0x60] sm:$0xff]
    %v74 = vld [vmem:[#allocation2 + $0x68] sm:$0xff]
    %v75 = vld [vmem:[#allocation2 + $0x70] sm:$0xff]
    %v76 = vld [vmem:[#allocation2 + $0x78] sm:$0xff]
    %v77 = vld [vmem:[#allocation2 + $0x80] sm:$0xff]
    %v78 = vld [vmem:[#allocation2 + $0x88] sm:$0xff]
    %v79 = vld [vmem:[#allocation2 + $0x90] sm:$0x3]
    %v80 = vld [vmem:[#allocation2 + $0x98] sm:$0x3]
    %v81 = vld [vmem:[#allocation2 + $0xa0] sm:$0x3]
    %vm82 = vcmask 408576
    %v84 = vsel %vm82, %v60, 0
    %vm86 = vcmask 1041408
    %v88 = vsel %vm86, %v79, 0
    %v91 = vsel %vm86, %v80, 0
    %v94 = vsel %vm86, %v81, 0
    %96 = vmatprep.subr.mxu0 0.0
    %97 = vmatpush1.msra.mxu0 0.0
    %98 = vmatprep.subr.mxu0 0.0
    %99 = vmatpush1.msra.mxu0 0.0
    %100 = vmatprep.subr.mxu0 0.0
    %101 = vmatpush1.msra.mxu0 0.0
    %102 = vmatprep.subr.mxu0 0.0
    %103 = vmatpush1.msra.mxu0 0.0
    %104 = vmatprep.subr.mxu0 0.0
    %105 = vmatpush1.msra.mxu0 0.0
    %106 = vmatprep.subr.mxu0 0.0
    %107 = vmatpush1.msra.mxu0 0.0
    %108 = vmatprep.subr.mxu0 0.0
    %109 = vmatpush1.msra.mxu0 0.0
    %110 = vmatprep.subr.mxu0 0.0
    %111 = vmatpush1.msra.mxu0 0.0
    %112 = vmatprep.subr.mxu0 0.0
    %113 = vmatpush1.msra.mxu0 0.0
    %114 = vmatprep.subr.mxu0 %v91
    %115 = vmatpush1.msra.mxu0 %v88
    %116 = vmatprep.subr.mxu0 %v77
    %117 = vmatpush1.msra.mxu0 %v76
    %118 = vmatprep.subr.mxu0 %v74
    %119 = vmatpush1.msra.mxu0 %v73
    %120 = vmatprep.subr.mxu0 %v71
    %121 = vmatpush1.msra.mxu0 %v70
    %122 = vmatprep.subr.mxu0 %v68
    %123 = vmatpush1.msra.mxu0 %v67
    %124 = vmatprep.subr.mxu0 %v65
    %125 = vmatpush1.msra.mxu0 %v64
    %126 = vmatprep.subr.mxu0 %v62
    %127 = vmatpush1.msra.mxu0 %v61
    %128 = vmatprep.subr.mxu0 0.0
    %129 = vmatpush2.msra.mxu0 0.0
    %130 = vmatprep.subr.mxu0 0.0
    %131 = vmatpush2.msra.mxu0 0.0
    %132 = vmatprep.subr.mxu0 0.0
    %133 = vmatpush2.msra.mxu0 0.0
    %134 = vmatprep.subr.mxu0 0.0
    %135 = vmatpush2.msra.mxu0 0.0
    %136 = vmatprep.subr.mxu0 0.0
    %137 = vmatpush2.msra.mxu0 0.0
    %138 = vmatprep.subr.mxu0 0.0
    %139 = vmatpush2.msra.mxu0 0.0
    %140 = vmatprep.subr.mxu0 0.0
    %141 = vmatpush2.msra.mxu0 0.0
    %142 = vmatprep.subr.mxu0 0.0
    %143 = vmatpush2.msra.mxu0 0.0
    %144 = vmatprep.subr.mxu0 0.0
    %145 = vmatpush2.msra.mxu0 0.0
    %146 = vmatprep.subr.mxu0 0.0
    %147 = vmatpush2.msra.mxu0 0.0
    %148 = vmatprep.subr.mxu0 0.0
    %149 = vmatpush2.msra.mxu0 0.0
    %150 = vmatprep.subr.mxu0 0.0
    %151 = vmatpush2.msra.mxu0 0.0
    %152 = vmatprep.subr.mxu0 0.0
    %153 = vmatpush2.msra.mxu0 0.0
    %154 = vmatprep.subr.mxu0 0.0
    %155 = vmatpush2.msra.mxu0 0.0
    %156 = vmatprep.subr.mxu0 0.0
    %157 = vmatpush2.msra.mxu0 0.0
    %158 = vmatprep.subr.mxu0 0.0
    %159 = vmatpush2.msra.mxu0 0.0
    %160 = vmatprep.mubr.f32.mxu0 0.0
    %161 = vmatmul.mubr.f32.gmra.mxu0 %v84
    %v162 = vpop.f32.mrf.mxu0
    %v163 = vadd.f32 0.0, %v162
    %v164 = vpop.f32.mrf.mxu0
    %v165 = vadd.f32 0.0, %v164
    %166 = vdwg.mxu0
    %167 = vmatprep.subr.mxu0 0.0
    %168 = vmatpush1.msra.mxu0 0.0
    %169 = vmatprep.subr.mxu0 0.0
    %170 = vmatpush1.msra.mxu0 0.0
    %171 = vmatprep.subr.mxu0 0.0
    %172 = vmatpush1.msra.mxu0 0.0
    %173 = vmatprep.subr.mxu0 0.0
    %174 = vmatpush1.msra.mxu0 0.0
    %175 = vmatprep.subr.mxu0 0.0
    %176 = vmatpush1.msra.mxu0 0.0
    %177 = vmatprep.subr.mxu0 0.0
    %178 = vmatpush1.msra.mxu0 0.0
    %179 = vmatprep.subr.mxu0 0.0
    %180 = vmatpush1.msra.mxu0 0.0
    %181 = vmatprep.subr.mxu0 0.0
    %182 = vmatpush1.msra.mxu0 0.0
    %183 = vmatprep.subr.mxu0 0.0
    %184 = vmatpush1.msra.mxu0 0.0
    %185 = vmatprep.subr.mxu0 0.0
    %186 = vmatpush1.msra.mxu0 %v94
    %187 = vmatprep.subr.mxu0 0.0
    %188 = vmatpush1.msra.mxu0 %v78
    %189 = vmatprep.subr.mxu0 0.0
    %190 = vmatpush1.msra.mxu0 %v75
    %191 = vmatprep.subr.mxu0 0.0
    %192 = vmatpush1.msra.mxu0 %v72
    %193 = vmatprep.subr.mxu0 0.0
    %194 = vmatpush1.msra.mxu0 %v69
    %195 = vmatprep.subr.mxu0 0.0
    %196 = vmatpush1.msra.mxu0 %v66
    %197 = vmatprep.subr.mxu0 0.0
    %198 = vmatpush1.msra.mxu0 %v63
    %199 = vmatprep.subr.mxu0 0.0
    %200 = vmatpush2.msra.mxu0 0.0
    %201 = vmatprep.subr.mxu0 0.0
    %202 = vmatpush2.msra.mxu0 0.0
    %203 = vmatprep.subr.mxu0 0.0
    %204 = vmatpush2.msra.mxu0 0.0
    %205 = vmatprep.subr.mxu0 0.0
    %206 = vmatpush2.msra.mxu0 0.0
    %207 = vmatprep.subr.mxu0 0.0
    %208 = vmatpush2.msra.mxu0 0.0
    %209 = vmatprep.subr.mxu0 0.0
    %210 = vmatpush2.msra.mxu0 0.0
    %211 = vmatprep.subr.mxu0 0.0
    %212 = vmatpush2.msra.mxu0 0.0
    %213 = vmatprep.subr.mxu0 0.0
    %214 = vmatpush2.msra.mxu0 0.0
    %215 = vmatprep.subr.mxu0 0.0
    %216 = vmatpush2.msra.mxu0 0.0
    %217 = vmatprep.subr.mxu0 0.0
    %218 = vmatpush2.msra.mxu0 0.0
    %219 = vmatprep.subr.mxu0 0.0
    %220 = vmatpush2.msra.mxu0 0.0
    %221 = vmatprep.subr.mxu0 0.0
    %222 = vmatpush2.msra.mxu0 0.0
    %223 = vmatprep.subr.mxu0 0.0
    %224 = vmatpush2.msra.mxu0 0.0
    %225 = vmatprep.subr.mxu0 0.0
    %226 = vmatpush2.msra.mxu0 0.0
    %227 = vmatprep.subr.mxu0 0.0
    %228 = vmatpush2.msra.mxu0 0.0
    %229 = vmatprep.subr.mxu0 0.0
    %230 = vmatpush2.msra.mxu0 0.0
    %231 = vmatprep.mubr.f32.mxu0 0.0
    %232 = vmatmul.mubr.f32.gmra.mxu0 %v84
    %v233 = vpop.f32.mrf.mxu0
    %v234 = vadd.f32 0.0, %v233
    %v235 = vpop.f32.mrf.mxu0
    %236 = vdwg.mxu0
    %v237 = vld [vmem:[#allocation5] sm:$0xff]
    %v238 = vld [vmem:[#allocation5 + $0x8] sm:$0xff]
    %v239 = vld [vmem:[#allocation5 + $0x10] sm:$0xff]
    %v240 = vld [vmem:[#allocation5 + $0x18] sm:$0xff]
    %v241 = vld [vmem:[#allocation5 + $0x20] sm:$0xff]
    %v242 = vld [vmem:[#allocation5 + $0x28] sm:$0xff]
    %v243 = vld [vmem:[#allocation5 + $0x30] sm:$0xff]
    %v244 = vld [vmem:[#allocation5 + $0x38] sm:$0xff]
    %v245 = vld [vmem:[#allocation5 + $0x40] sm:$0xff]
    %v246 = vld [vmem:[#allocation5 + $0x48] sm:$0xff]
    %v247 = vld [vmem:[#allocation5 + $0x50] sm:$0xff]
    %v248 = vld [vmem:[#allocation5 + $0x58] sm:$0xff]
    %v249 = vld [vmem:[#allocation5 + $0x60] sm:$0xff]
    %v250 = vld [vmem:[#allocation5 + $0x68] sm:$0xff]
    %v251 = vld [vmem:[#allocation5 + $0x70] sm:$0xff]
    %v252 = vld [vmem:[#allocation5 + $0x78] sm:$0xff]
    %v253 = vld [vmem:[#allocation5 + $0x80] sm:$0xff]
    %v254 = vld [vmem:[#allocation5 + $0x88] sm:$0xff]
    %v255 = vld [vmem:[#allocation5 + $0x90] sm:$0xff]
    %v256 = vld [vmem:[#allocation5 + $0x98] sm:$0xff]
    %v257 = vld [vmem:[#allocation5 + $0xa0] sm:$0xff]
    %v258 = vld [vmem:[#allocation5 + $0xa8] sm:$0xff]
    %v259 = vld [vmem:[#allocation5 + $0xb0] sm:$0xff]
    %v260 = vld [vmem:[#allocation5 + $0xb8] sm:$0xff]
    %v261 = vld [vmem:[#allocation5 + $0xc0] sm:$0xff]
    %v262 = vld [vmem:[#allocation5 + $0xc8] sm:$0xff]
    %v263 = vld [vmem:[#allocation5 + $0xd0] sm:$0xff]
    %v264 = vld [vmem:[#allocation5 + $0xd8] sm:$0xff]
    %v265 = vld [vmem:[#allocation5 + $0xe0] sm:$0xff]
    %v266 = vld [vmem:[#allocation5 + $0xe8] sm:$0xff]
    %v267 = vld [vmem:[#allocation5 + $0xf0] sm:$0xff]
    %v268 = vld [vmem:[#allocation5 + $0xf8] sm:$0xff]
    %v269 = vld [vmem:[#allocation5 + $0x100] sm:$0xff]
    %v270 = vld [vmem:[#allocation5 + $0x108] sm:$0xff]
    %v271 = vld [vmem:[#allocation5 + $0x110] sm:$0xff]
    %v272 = vld [vmem:[#allocation5 + $0x118] sm:$0xff]
    %v273 = vld [vmem:[#allocation5 + $0x120] sm:$0xff]
    %v274 = vld [vmem:[#allocation5 + $0x128] sm:$0xff]
    %v275 = vld [vmem:[#allocation5 + $0x130] sm:$0xff]
    %v276 = vld [vmem:[#allocation5 + $0x138] sm:$0xff]
    %v277 = vld [vmem:[#allocation5 + $0x140] sm:$0xff]
    %v278 = vld [vmem:[#allocation5 + $0x148] sm:$0xff]
    %v279 = vld [vmem:[#allocation5 + $0x150] sm:$0xff]
    %v280 = vld [vmem:[#allocation5 + $0x158] sm:$0xff]
    %v281 = vld [vmem:[#allocation5 + $0x160] sm:$0xff]
    %v282 = vld [vmem:[#allocation5 + $0x168] sm:$0xff]
    %v283 = vld [vmem:[#allocation5 + $0x170] sm:$0xff]
    %v284 = vld [vmem:[#allocation5 + $0x178] sm:$0xff]
    %v285 = vld [vmem:[%s3] sm:$0x1]
    %v286 = vld [vmem:[%s4] sm:$0x1]
    %287 = vmatprep.subr.mxu0 %v283
    %288 = vmatpush1.msra.mxu0 %v282
    %289 = vmatprep.subr.mxu0 %v280
    %290 = vmatpush1.msra.mxu0 %v279
    %291 = vmatprep.subr.mxu0 %v277
    %292 = vmatpush1.msra.mxu0 %v276
    %293 = vmatprep.subr.mxu0 %v274
    %294 = vmatpush1.msra.mxu0 %v273
    %295 = vmatprep.subr.mxu0 %v271
    %296 = vmatpush1.msra.mxu0 %v270
    %297 = vmatprep.subr.mxu0 %v268
    %298 = vmatpush1.msra.mxu0 %v267
    %299 = vmatprep.subr.mxu0 %v265
    %300 = vmatpush1.msra.mxu0 %v264
    %301 = vmatprep.subr.mxu0 %v262
    %302 = vmatpush1.msra.mxu0 %v261
    %303 = vmatprep.subr.mxu0 %v259
    %304 = vmatpush1.msra.mxu0 %v258
    %305 = vmatprep.subr.mxu0 %v256
    %306 = vmatpush1.msra.mxu0 %v255
    %307 = vmatprep.subr.mxu0 %v253
    %308 = vmatpush1.msra.mxu0 %v252
    %309 = vmatprep.subr.mxu0 %v250
    %310 = vmatpush1.msra.mxu0 %v249
    %311 = vmatprep.subr.mxu0 %v247
    %312 = vmatpush1.msra.mxu0 %v246
    %313 = vmatprep.subr.mxu0 %v244
    %314 = vmatpush1.msra.mxu0 %v243
    %315 = vmatprep.subr.mxu0 %v241
    %316 = vmatpush1.msra.mxu0 %v240
    %317 = vmatprep.subr.mxu0 %v238
    %318 = vmatpush1.msra.mxu0 %v237
    %319 = vmatprep.subr.mxu0 0.0
    %320 = vmatpush2.msra.mxu0 0.0
    %321 = vmatprep.subr.mxu0 0.0
    %322 = vmatpush2.msra.mxu0 0.0
    %323 = vmatprep.subr.mxu0 0.0
    %324 = vmatpush2.msra.mxu0 0.0
    %325 = vmatprep.subr.mxu0 0.0
    %326 = vmatpush2.msra.mxu0 0.0
    %327 = vmatprep.subr.mxu0 0.0
    %328 = vmatpush2.msra.mxu0 0.0
    %329 = vmatprep.subr.mxu0 0.0
    %330 = vmatpush2.msra.mxu0 0.0
    %331 = vmatprep.subr.mxu0 0.0
    %332 = vmatpush2.msra.mxu0 0.0
    %333 = vmatprep.subr.mxu0 0.0
    %334 = vmatpush2.msra.mxu0 0.0
    %335 = vmatprep.subr.mxu0 0.0
    %336 = vmatpush2.msra.mxu0 0.0
    %337 = vmatprep.subr.mxu0 0.0
    %338 = vmatpush2.msra.mxu0 0.0
    %339 = vmatprep.subr.mxu0 0.0
    %340 = vmatpush2.msra.mxu0 0.0
    %341 = vmatprep.subr.mxu0 0.0
    %342 = vmatpush2.msra.mxu0 0.0
    %343 = vmatprep.subr.mxu0 0.0
    %344 = vmatpush2.msra.mxu0 0.0
    %345 = vmatprep.subr.mxu0 0.0
    %346 = vmatpush2.msra.mxu0 0.0
    %347 = vmatprep.subr.mxu0 0.0
    %348 = vmatpush2.msra.mxu0 0.0
    %349 = vmatprep.subr.mxu0 0.0
    %350 = vmatpush2.msra.mxu0 0.0
    %351 = vmatprep.mubr.f32.mxu0 0.0
    %352 = vmatmul.mubr.f32.gmra.mxu0 %v286
    %v353 = vpop.f32.mrf.mxu0
    %v354 = vadd.f32 0.0, %v353
    %v355 = vpop.f32.mrf.mxu0
    %v356 = vadd.f32 0.0, %v355
    %357 = vdwg.mxu0
    %358 = vmatprep.subr.mxu0 0.0
    %359 = vmatpush1.msra.mxu0 %v284
    %360 = vmatprep.subr.mxu0 0.0
    %361 = vmatpush1.msra.mxu0 %v281
    %362 = vmatprep.subr.mxu0 0.0
    %363 = vmatpush1.msra.mxu0 %v278
    %364 = vmatprep.subr.mxu0 0.0
    %365 = vmatpush1.msra.mxu0 %v275
    %366 = vmatprep.subr.mxu0 0.0
    %367 = vmatpush1.msra.mxu0 %v272
    %368 = vmatprep.subr.mxu0 0.0
    %369 = vmatpush1.msra.mxu0 %v269
    %370 = vmatprep.subr.mxu0 0.0
    %371 = vmatpush1.msra.mxu0 %v266
    %372 = vmatprep.subr.mxu0 0.0
    %373 = vmatpush1.msra.mxu0 %v263
    %374 = vmatprep.subr.mxu0 0.0
    %375 = vmatpush1.msra.mxu0 %v260
    %376 = vmatprep.subr.mxu0 0.0
    %377 = vmatpush1.msra.mxu0 %v257
    %378 = vmatprep.subr.mxu0 0.0
    %379 = vmatpush1.msra.mxu0 %v254
    %380 = vmatprep.subr.mxu0 0.0
    %381 = vmatpush1.msra.mxu0 %v251
    %382 = vmatprep.subr.mxu0 0.0
    %383 = vmatpush1.msra.mxu0 %v248
    %384 = vmatprep.subr.mxu0 0.0
    %385 = vmatpush1.msra.mxu0 %v245
    %386 = vmatprep.subr.mxu0 0.0
    %387 = vmatpush1.msra.mxu0 %v242
    %388 = vmatprep.subr.mxu0 0.0
    %389 = vmatpush1.msra.mxu0 %v239
    %390 = vmatprep.subr.mxu0 0.0
    %391 = vmatpush2.msra.mxu0 0.0
    %392 = vmatprep.subr.mxu0 0.0
    %393 = vmatpush2.msra.mxu0 0.0
    %394 = vmatprep.subr.mxu0 0.0
    %395 = vmatpush2.msra.mxu0 0.0
    %396 = vmatprep.subr.mxu0 0.0
    %397 = vmatpush2.msra.mxu0 0.0
    %398 = vmatprep.subr.mxu0 0.0
    %399 = vmatpush2.msra.mxu0 0.0
    %400 = vmatprep.subr.mxu0 0.0
    %401 = vmatpush2.msra.mxu0 0.0
    %402 = vmatprep.subr.mxu0 0.0
    %403 = vmatpush2.msra.mxu0 0.0
    %404 = vmatprep.subr.mxu0 0.0
    %405 = vmatpush2.msra.mxu0 0.0
    %406 = vmatprep.subr.mxu0 0.0
    %407 = vmatpush2.msra.mxu0 0.0
    %408 = vmatprep.subr.mxu0 0.0
    %409 = vmatpush2.msra.mxu0 0.0
    %410 = vmatprep.subr.mxu0 0.0
    %411 = vmatpush2.msra.mxu0 0.0
    %412 = vmatprep.subr.mxu0 0.0
    %413 = vmatpush2.msra.mxu0 0.0
    %414 = vmatprep.subr.mxu0 0.0
    %415 = vmatpush2.msra.mxu0 0.0
    %416 = vmatprep.subr.mxu0 0.0
    %417 = vmatpush2.msra.mxu0 0.0
    %418 = vmatprep.subr.mxu0 0.0
    %419 = vmatpush2.msra.mxu0 0.0
    %420 = vmatprep.subr.mxu0 0.0
    %421 = vmatpush2.msra.mxu0 0.0
    %422 = vmatprep.mubr.f32.mxu0 0.0
    %423 = vmatmul.mubr.f32.gmra.mxu0 %v286
    %v424 = vpop.f32.mrf.mxu0
    %v425 = vadd.f32 0.0, %v424
    %v426 = vpop.f32.mrf.mxu0
    %427 = vdwg.mxu0
    %v428 = vadd.f32 %v163, %v354
    %v429 = vxor.u32 %v428, 2147483648
    %v430 = vmul.f32 %v429, 1.442695
    %v431 = vpow.pop %v430
    %v432 = vadd.f32 %v431, 1.0
    %v433 = vrcp.pop %v432
    %v434 = vmul.f32 1.0, %v433
    %v435 = vadd.f32 %v165, %v356
    %v436 = vxor.u32 %v435, 2147483648
    %v437 = vmul.f32 %v436, 1.442695
    %v438 = vpow.pop %v437
    %v439 = vadd.f32 %v438, 1.0
    %v440 = vrcp.pop %v439
    %v441 = vmul.f32 1.0, %v440
    %v442 = vadd.f32 %v425, %v285
    %v443 = vmul.f32 %v434, %v442
    %v444 = vadd.f32 %v234, %v443
    %v445 = vtanh.pop %v444
    %v446 = vsub.f32 %v286, %v445
    %v447 = vmul.f32 %v441, %v446
    %v448 = vadd.f32 %v445, %v447
    %449 = vst [vmem:[#allocation7] sm:$0x1] %v448
    %450 = vmatprep.subr.mxu0 %v283
    %451 = vmatpush1.msra.mxu0 %v282
    %452 = vmatprep.subr.mxu0 %v280
    %453 = vmatpush1.msra.mxu0 %v279
    %454 = vmatprep.subr.mxu0 %v277
    %455 = vmatpush1.msra.mxu0 %v276
    %456 = vmatprep.subr.mxu0 %v274
    %457 = vmatpush1.msra.mxu0 %v273
    %458 = vmatprep.subr.mxu0 %v271
    %459 = vmatpush1.msra.mxu0 %v270
    %460 = vmatprep.subr.mxu0 %v268
    %461 = vmatpush1.msra.mxu0 %v267
    %462 = vmatprep.subr.mxu0 %v265
    %463 = vmatpush1.msra.mxu0 %v264
    %464 = vmatprep.subr.mxu0 %v262
    %465 = vmatpush1.msra.mxu0 %v261
    %466 = vmatprep.subr.mxu0 %v259
    %467 = vmatpush1.msra.mxu0 %v258
    %468 = vmatprep.subr.mxu0 %v256
    %469 = vmatpush1.msra.mxu0 %v255
    %470 = vmatprep.subr.mxu0 %v253
    %471 = vmatpush1.msra.mxu0 %v252
    %472 = vmatprep.subr.mxu0 %v250
    %473 = vmatpush1.msra.mxu0 %v249
    %474 = vmatprep.subr.mxu0 %v247
    %475 = vmatpush1.msra.mxu0 %v246
    %476 = vmatprep.subr.mxu0 %v244
    %477 = vmatpush1.msra.mxu0 %v243
    %478 = vmatprep.subr.mxu0 %v241
    %479 = vmatpush1.msra.mxu0 %v240
    %480 = vmatprep.subr.mxu0 %v238
    %481 = vmatpush1.msra.mxu0 %v237
    %482 = vmatprep.subr.mxu0 0.0
    %483 = vmatpush2.msra.mxu0 0.0
    %484 = vmatprep.subr.mxu0 0.0
    %485 = vmatpush2.msra.mxu0 0.0
    %486 = vmatprep.subr.mxu0 0.0
    %487 = vmatpush2.msra.mxu0 0.0
    %488 = vmatprep.subr.mxu0 0.0
    %489 = vmatpush2.msra.mxu0 0.0
    %490 = vmatprep.subr.mxu0 0.0
    %491 = vmatpush2.msra.mxu0 0.0
    %492 = vmatprep.subr.mxu0 0.0
    %493 = vmatpush2.msra.mxu0 0.0
    %494 = vmatprep.subr.mxu0 0.0
    %495 = vmatpush2.msra.mxu0 0.0
    %496 = vmatprep.subr.mxu0 0.0
    %497 = vmatpush2.msra.mxu0 0.0
    %498 = vmatprep.subr.mxu0 0.0
    %499 = vmatpush2.msra.mxu0 0.0
    %500 = vmatprep.subr.mxu0 0.0
    %501 = vmatpush2.msra.mxu0 0.0
    %502 = vmatprep.subr.mxu0 0.0
    %503 = vmatpush2.msra.mxu0 0.0
    %504 = vmatprep.subr.mxu0 0.0
    %505 = vmatpush2.msra.mxu0 0.0
    %506 = vmatprep.subr.mxu0 0.0
    %507 = vmatpush2.msra.mxu0 0.0
    %508 = vmatprep.subr.mxu0 0.0
    %509 = vmatpush2.msra.mxu0 0.0
    %510 = vmatprep.subr.mxu0 0.0
    %511 = vmatpush2.msra.mxu0 0.0
    %512 = vmatprep.subr.mxu0 0.0
    %513 = vmatpush2.msra.mxu0 0.0
    %514 = vmatprep.mubr.f32.mxu0 0.0
    %515 = vmatmul.mubr.f32.gmra.mxu0 %v448
    %v516 = vpop.f32.mrf.mxu0
    %v517 = vadd.f32 0.0, %v516
    %v518 = vpop.f32.mrf.mxu0
    %v519 = vadd.f32 0.0, %v518
    %520 = vdwg.mxu0
    %521 = vmatprep.subr.mxu0 0.0
    %522 = vmatpush1.msra.mxu0 %v284
    %523 = vmatprep.subr.mxu0 0.0
    %524 = vmatpush1.msra.mxu0 %v281
    %525 = vmatprep.subr.mxu0 0.0
    %526 = vmatpush1.msra.mxu0 %v278
    %527 = vmatprep.subr.mxu0 0.0
    %528 = vmatpush1.msra.mxu0 %v275
    %529 = vmatprep.subr.mxu0 0.0
    %530 = vmatpush1.msra.mxu0 %v272
    %531 = vmatprep.subr.mxu0 0.0
    %532 = vmatpush1.msra.mxu0 %v269
    %533 = vmatprep.subr.mxu0 0.0
    %534 = vmatpush1.msra.mxu0 %v266
    %535 = vmatprep.subr.mxu0 0.0
    %536 = vmatpush1.msra.mxu0 %v263
    %537 = vmatprep.subr.mxu0 0.0
    %538 = vmatpush1.msra.mxu0 %v260
    %539 = vmatprep.subr.mxu0 0.0
    %540 = vmatpush1.msra.mxu0 %v257
    %541 = vmatprep.subr.mxu0 0.0
    %542 = vmatpush1.msra.mxu0 %v254
    %543 = vmatprep.subr.mxu0 0.0
    %544 = vmatpush1.msra.mxu0 %v251
    %545 = vmatprep.subr.mxu0 0.0
    %546 = vmatpush1.msra.mxu0 %v248
    %547 = vmatprep.subr.mxu0 0.0
    %548 = vmatpush1.msra.mxu0 %v245
    %549 = vmatprep.subr.mxu0 0.0
    %550 = vmatpush1.msra.mxu0 %v242
    %551 = vmatprep.subr.mxu0 0.0
    %552 = vmatpush1.msra.mxu0 %v239
    %553 = vmatprep.subr.mxu0 0.0
    %554 = vmatpush2.msra.mxu0 0.0
    %555 = vmatprep.subr.mxu0 0.0
    %556 = vmatpush2.msra.mxu0 0.0
    %557 = vmatprep.subr.mxu0 0.0
    %558 = vmatpush2.msra.mxu0 0.0
    %559 = vmatprep.subr.mxu0 0.0
    %560 = vmatpush2.msra.mxu0 0.0
    %561 = vmatprep.subr.mxu0 0.0
    %562 = vmatpush2.msra.mxu0 0.0
    %563 = vmatprep.subr.mxu0 0.0
    %564 = vmatpush2.msra.mxu0 0.0
    %565 = vmatprep.subr.mxu0 0.0
    %566 = vmatpush2.msra.mxu0 0.0
    %567 = vmatprep.subr.mxu0 0.0
    %568 = vmatpush2.msra.mxu0 0.0
    %569 = vmatprep.subr.mxu0 0.0
    %570 = vmatpush2.msra.mxu0 0.0
    %571 = vmatprep.subr.mxu0 0.0
    %572 = vmatpush2.msra.mxu0 0.0
    %573 = vmatprep.subr.mxu0 0.0
    %574 = vmatpush2.msra.mxu0 0.0
    %575 = vmatprep.subr.mxu0 0.0
    %576 = vmatpush2.msra.mxu0 0.0
    %577 = vmatprep.subr.mxu0 0.0
    %578 = vmatpush2.msra.mxu0 0.0
    %579 = vmatprep.subr.mxu0 0.0
    %580 = vmatpush2.msra.mxu0 0.0
    %581 = vmatprep.subr.mxu0 0.0
    %582 = vmatpush2.msra.mxu0 0.0
    %583 = vmatprep.subr.mxu0 0.0
    %584 = vmatpush2.msra.mxu0 0.0
    %585 = vmatprep.mubr.f32.mxu0 0.0
    %586 = vmatmul.mubr.f32.gmra.mxu0 %v448
    %v587 = vpop.f32.mrf.mxu0
    %v588 = vadd.f32 0.0, %v587
    %v589 = vpop.f32.mrf.mxu0
    %590 = vdwg.mxu0
    %v592 = vrot.slane %v517, 7
    %v594 = vadd.f32 %v163, %v592
    %v595 = vxor.u32 %v594, 2147483648
    %v596 = vmul.f32 %v595, 1.442695
    %v597 = vpow.pop %v596
    %v598 = vadd.f32 %v597, 1.0
    %v599 = vrcp.pop %v598
    %v600 = vmul.f32 1.0, %v599
    %v602 = vrot.slane %v519, 7
    %v604 = vadd.f32 %v165, %v602
    %v605 = vxor.u32 %v604, 2147483648
    %v606 = vmul.f32 %v605, 1.442695
    %v607 = vpow.pop %v606
    %v608 = vadd.f32 %v607, 1.0
    %v609 = vrcp.pop %v608
    %v610 = vmul.f32 1.0, %v609
    %v611 = vadd.f32 %v588, %v285
    %v613 = vrot.slane %v611, 7
    %v615 = vmul.f32 %v600, %v613
    %v616 = vadd.f32 %v234, %v615
    %v617 = vtanh.pop %v616
    %v619 = vrot.slane %v617, 1
    %v621 = vsub.f32 %v448, %v619
    %v623 = vrot.slane %v621, 7
    %v625 = vmul.f32 %v610, %v623
    %v626 = vadd.f32 %v617, %v625
    %627 = vst [vmem:[#allocation7] sm:$0x2] %v626
    %v629 = vrot.slane %v626, 1
    %631 = vmatprep.subr.mxu0 %v283
    %632 = vmatpush1.msra.mxu0 %v282
    %633 = vmatprep.subr.mxu0 %v280
    %634 = vmatpush1.msra.mxu0 %v279
    %635 = vmatprep.subr.mxu0 %v277
    %636 = vmatpush1.msra.mxu0 %v276
    %637 = vmatprep.subr.mxu0 %v274
    %638 = vmatpush1.msra.mxu0 %v273
    %639 = vmatprep.subr.mxu0 %v271
    %640 = vmatpush1.msra.mxu0 %v270
    %641 = vmatprep.subr.mxu0 %v268
    %642 = vmatpush1.msra.mxu0 %v267
    %643 = vmatprep.subr.mxu0 %v265
    %644 = vmatpush1.msra.mxu0 %v264
    %645 = vmatprep.subr.mxu0 %v262
    %646 = vmatpush1.msra.mxu0 %v261
    %647 = vmatprep.subr.mxu0 %v259
    %648 = vmatpush1.msra.mxu0 %v258
    %649 = vmatprep.subr.mxu0 %v256
    %650 = vmatpush1.msra.mxu0 %v255
    %651 = vmatprep.subr.mxu0 %v253
    %652 = vmatpush1.msra.mxu0 %v252
    %653 = vmatprep.subr.mxu0 %v250
    %654 = vmatpush1.msra.mxu0 %v249
    %655 = vmatprep.subr.mxu0 %v247
    %656 = vmatpush1.msra.mxu0 %v246
    %657 = vmatprep.subr.mxu0 %v244
    %658 = vmatpush1.msra.mxu0 %v243
    %659 = vmatprep.subr.mxu0 %v241
    %660 = vmatpush1.msra.mxu0 %v240
    %661 = vmatprep.subr.mxu0 %v238
    %662 = vmatpush1.msra.mxu0 %v237
    %663 = vmatprep.subr.mxu0 0.0
    %664 = vmatpush2.msra.mxu0 0.0
    %665 = vmatprep.subr.mxu0 0.0
    %666 = vmatpush2.msra.mxu0 0.0
    %667 = vmatprep.subr.mxu0 0.0
    %668 = vmatpush2.msra.mxu0 0.0
    %669 = vmatprep.subr.mxu0 0.0
    %670 = vmatpush2.msra.mxu0 0.0
    %671 = vmatprep.subr.mxu0 0.0
    %672 = vmatpush2.msra.mxu0 0.0
    %673 = vmatprep.subr.mxu0 0.0
    %674 = vmatpush2.msra.mxu0 0.0
    %675 = vmatprep.subr.mxu0 0.0
    %676 = vmatpush2.msra.mxu0 0.0
    %677 = vmatprep.subr.mxu0 0.0
    %678 = vmatpush2.msra.mxu0 0.0
    %679 = vmatprep.subr.mxu0 0.0
    %680 = vmatpush2.msra.mxu0 0.0
    %681 = vmatprep.subr.mxu0 0.0
    %682 = vmatpush2.msra.mxu0 0.0
    %683 = vmatprep.subr.mxu0 0.0
    %684 = vmatpush2.msra.mxu0 0.0
    %685 = vmatprep.subr.mxu0 0.0
    %686 = vmatpush2.msra.mxu0 0.0
    %687 = vmatprep.subr.mxu0 0.0
    %688 = vmatpush2.msra.mxu0 0.0
    %689 = vmatprep.subr.mxu0 0.0
    %690 = vmatpush2.msra.mxu0 0.0
    %691 = vmatprep.subr.mxu0 0.0
    %692 = vmatpush2.msra.mxu0 0.0
    %693 = vmatprep.subr.mxu0 0.0
    %694 = vmatpush2.msra.mxu0 0.0
    %695 = vmatprep.mubr.f32.mxu0 0.0
    %696 = vmatmul.mubr.f32.gmra.mxu0 %v629
    %v697 = vpop.f32.mrf.mxu0
    %v698 = vadd.f32 0.0, %v697
    %v699 = vpop.f32.mrf.mxu0
    %v700 = vadd.f32 0.0, %v699
    %701 = vdwg.mxu0
    %702 = vmatprep.subr.mxu0 0.0
    %703 = vmatpush1.msra.mxu0 %v284
    %704 = vmatprep.subr.mxu0 0.0
    %705 = vmatpush1.msra.mxu0 %v281
    %706 = vmatprep.subr.mxu0 0.0
    %707 = vmatpush1.msra.mxu0 %v278
    %708 = vmatprep.subr.mxu0 0.0
    %709 = vmatpush1.msra.mxu0 %v275
    %710 = vmatprep.subr.mxu0 0.0
    %711 = vmatpush1.msra.mxu0 %v272
    %712 = vmatprep.subr.mxu0 0.0
    %713 = vmatpush1.msra.mxu0 %v269
    %714 = vmatprep.subr.mxu0 0.0
    %715 = vmatpush1.msra.mxu0 %v266
    %716 = vmatprep.subr.mxu0 0.0
    %717 = vmatpush1.msra.mxu0 %v263
    %718 = vmatprep.subr.mxu0 0.0
    %719 = vmatpush1.msra.mxu0 %v260
    %720 = vmatprep.subr.mxu0 0.0
    %721 = vmatpush1.msra.mxu0 %v257
    %722 = vmatprep.subr.mxu0 0.0
    %723 = vmatpush1.msra.mxu0 %v254
    %724 = vmatprep.subr.mxu0 0.0
    %725 = vmatpush1.msra.mxu0 %v251
    %726 = vmatprep.subr.mxu0 0.0
    %727 = vmatpush1.msra.mxu0 %v248
    %728 = vmatprep.subr.mxu0 0.0
    %729 = vmatpush1.msra.mxu0 %v245
    %730 = vmatprep.subr.mxu0 0.0
    %731 = vmatpush1.msra.mxu0 %v242
    %732 = vmatprep.subr.mxu0 0.0
    %733 = vmatpush1.msra.mxu0 %v239
    %734 = vmatprep.subr.mxu0 0.0
    %735 = vmatpush2.msra.mxu0 0.0
    %736 = vmatprep.subr.mxu0 0.0
    %737 = vmatpush2.msra.mxu0 0.0
    %738 = vmatprep.subr.mxu0 0.0
    %739 = vmatpush2.msra.mxu0 0.0
    %740 = vmatprep.subr.mxu0 0.0
    %741 = vmatpush2.msra.mxu0 0.0
    %742 = vmatprep.subr.mxu0 0.0
    %743 = vmatpush2.msra.mxu0 0.0
    %744 = vmatprep.subr.mxu0 0.0
    %745 = vmatpush2.msra.mxu0 0.0
    %746 = vmatprep.subr.mxu0 0.0
    %747 = vmatpush2.msra.mxu0 0.0
    %748 = vmatprep.subr.mxu0 0.0
    %749 = vmatpush2.msra.mxu0 0.0
    %750 = vmatprep.subr.mxu0 0.0
    %751 = vmatpush2.msra.mxu0 0.0
    %752 = vmatprep.subr.mxu0 0.0
    %753 = vmatpush2.msra.mxu0 0.0
    %754 = vmatprep.subr.mxu0 0.0
    %755 = vmatpush2.msra.mxu0 0.0
    %756 = vmatprep.subr.mxu0 0.0
    %757 = vmatpush2.msra.mxu0 0.0
    %758 = vmatprep.subr.mxu0 0.0
    %759 = vmatpush2.msra.mxu0 0.0
    %760 = vmatprep.subr.mxu0 0.0
    %761 = vmatpush2.msra.mxu0 0.0
    %762 = vmatprep.subr.mxu0 0.0
    %763 = vmatpush2.msra.mxu0 0.0
    %764 = vmatprep.subr.mxu0 0.0
    %765 = vmatpush2.msra.mxu0 0.0
    %766 = vmatprep.mubr.f32.mxu0 0.0
    %767 = vmatmul.mubr.f32.gmra.mxu0 %v629
    %v768 = vpop.f32.mrf.mxu0
    %v769 = vadd.f32 0.0, %v768
    %v770 = vpop.f32.mrf.mxu0
    %771 = vdwg.mxu0
    %v773 = vrot.slane %v698, 6
    %v775 = vadd.f32 %v163, %v773
    %v776 = vxor.u32 %v775, 2147483648
    %v777 = vmul.f32 %v776, 1.442695
    %v778 = vpow.pop %v777
    %v779 = vadd.f32 %v778, 1.0
    %v780 = vrcp.pop %v779
    %v781 = vmul.f32 1.0, %v780
    %v783 = vrot.slane %v700, 6
    %v785 = vadd.f32 %v165, %v783
    %v786 = vxor.u32 %v785, 2147483648
    %v787 = vmul.f32 %v786, 1.442695
    %v788 = vpow.pop %v787
    %v789 = vadd.f32 %v788, 1.0
    %v790 = vrcp.pop %v789
    %v791 = vmul.f32 1.0, %v790
    %v792 = vadd.f32 %v769, %v285
    %v794 = vrot.slane %v792, 6
    %v796 = vmul.f32 %v781, %v794
    %v797 = vadd.f32 %v234, %v796
    %v798 = vtanh.pop %v797
    %v800 = vrot.slane %v798, 1
    %v802 = vsub.f32 %v626, %v800
    %v804 = vrot.slane %v802, 7
    %v806 = vmul.f32 %v791, %v804
    %v807 = vadd.f32 %v798, %v806
    %808 = vst [vmem:[#allocation7] sm:$0x4] %v807
    %v810 = vrot.slane %v807, 2
    %812 = vmatprep.subr.mxu0 %v283
    %813 = vmatpush1.msra.mxu0 %v282
    %814 = vmatprep.subr.mxu0 %v280
    %815 = vmatpush1.msra.mxu0 %v279
    %816 = vmatprep.subr.mxu0 %v277
    %817 = vmatpush1.msra.mxu0 %v276
    %818 = vmatprep.subr.mxu0 %v274
    %819 = vmatpush1.msra.mxu0 %v273
    %820 = vmatprep.subr.mxu0 %v271
    %821 = vmatpush1.msra.mxu0 %v270
    %822 = vmatprep.subr.mxu0 %v268
    %823 = vmatpush1.msra.mxu0 %v267
    %824 = vmatprep.subr.mxu0 %v265
    %825 = vmatpush1.msra.mxu0 %v264
    %826 = vmatprep.subr.mxu0 %v262
    %827 = vmatpush1.msra.mxu0 %v261
    %828 = vmatprep.subr.mxu0 %v259
    %829 = vmatpush1.msra.mxu0 %v258
    %830 = vmatprep.subr.mxu0 %v256
    %831 = vmatpush1.msra.mxu0 %v255
    %832 = vmatprep.subr.mxu0 %v253
    %833 = vmatpush1.msra.mxu0 %v252
    %834 = vmatprep.subr.mxu0 %v250
    %835 = vmatpush1.msra.mxu0 %v249
    %836 = vmatprep.subr.mxu0 %v247
    %837 = vmatpush1.msra.mxu0 %v246
    %838 = vmatprep.subr.mxu0 %v244
    %839 = vmatpush1.msra.mxu0 %v243
    %840 = vmatprep.subr.mxu0 %v241
    %841 = vmatpush1.msra.mxu0 %v240
    %842 = vmatprep.subr.mxu0 %v238
    %843 = vmatpush1.msra.mxu0 %v237
    %844 = vmatprep.subr.mxu0 0.0
    %845 = vmatpush2.msra.mxu0 0.0
    %846 = vmatprep.subr.mxu0 0.0
    %847 = vmatpush2.msra.mxu0 0.0
    %848 = vmatprep.subr.mxu0 0.0
    %849 = vmatpush2.msra.mxu0 0.0
    %850 = vmatprep.subr.mxu0 0.0
    %851 = vmatpush2.msra.mxu0 0.0
    %852 = vmatprep.subr.mxu0 0.0
    %853 = vmatpush2.msra.mxu0 0.0
    %854 = vmatprep.subr.mxu0 0.0
    %855 = vmatpush2.msra.mxu0 0.0
    %856 = vmatprep.subr.mxu0 0.0
    %857 = vmatpush2.msra.mxu0 0.0
    %858 = vmatprep.subr.mxu0 0.0
    %859 = vmatpush2.msra.mxu0 0.0
    %860 = vmatprep.subr.mxu0 0.0
    %861 = vmatpush2.msra.mxu0 0.0
    %862 = vmatprep.subr.mxu0 0.0
    %863 = vmatpush2.msra.mxu0 0.0
    %864 = vmatprep.subr.mxu0 0.0
    %865 = vmatpush2.msra.mxu0 0.0
    %866 = vmatprep.subr.mxu0 0.0
    %867 = vmatpush2.msra.mxu0 0.0
    %868 = vmatprep.subr.mxu0 0.0
    %869 = vmatpush2.msra.mxu0 0.0
    %870 = vmatprep.subr.mxu0 0.0
    %871 = vmatpush2.msra.mxu0 0.0
    %872 = vmatprep.subr.mxu0 0.0
    %873 = vmatpush2.msra.mxu0 0.0
    %874 = vmatprep.subr.mxu0 0.0
    %875 = vmatpush2.msra.mxu0 0.0
    %876 = vmatprep.mubr.f32.mxu0 0.0
    %877 = vmatmul.mubr.f32.gmra.mxu0 %v810
    %v878 = vpop.f32.mrf.mxu0
    %v879 = vadd.f32 0.0, %v878
    %v880 = vpop.f32.mrf.mxu0
    %v881 = vadd.f32 0.0, %v880
    %882 = vdwg.mxu0
    %883 = vmatprep.subr.mxu0 0.0
    %884 = vmatpush1.msra.mxu0 %v284
    %885 = vmatprep.subr.mxu0 0.0
    %886 = vmatpush1.msra.mxu0 %v281
    %887 = vmatprep.subr.mxu0 0.0
    %888 = vmatpush1.msra.mxu0 %v278
    %889 = vmatprep.subr.mxu0 0.0
    %890 = vmatpush1.msra.mxu0 %v275
    %891 = vmatprep.subr.mxu0 0.0
    %892 = vmatpush1.msra.mxu0 %v272
    %893 = vmatprep.subr.mxu0 0.0
    %894 = vmatpush1.msra.mxu0 %v269
    %895 = vmatprep.subr.mxu0 0.0
    %896 = vmatpush1.msra.mxu0 %v266
    %897 = vmatprep.subr.mxu0 0.0
    %898 = vmatpush1.msra.mxu0 %v263
    %899 = vmatprep.subr.mxu0 0.0
    %900 = vmatpush1.msra.mxu0 %v260
    %901 = vmatprep.subr.mxu0 0.0
    %902 = vmatpush1.msra.mxu0 %v257
    %903 = vmatprep.subr.mxu0 0.0
    %904 = vmatpush1.msra.mxu0 %v254
    %905 = vmatprep.subr.mxu0 0.0
    %906 = vmatpush1.msra.mxu0 %v251
    %907 = vmatprep.subr.mxu0 0.0
    %908 = vmatpush1.msra.mxu0 %v248
    %909 = vmatprep.subr.mxu0 0.0
    %910 = vmatpush1.msra.mxu0 %v245
    %911 = vmatprep.subr.mxu0 0.0
    %912 = vmatpush1.msra.mxu0 %v242
    %913 = vmatprep.subr.mxu0 0.0
    %914 = vmatpush1.msra.mxu0 %v239
    %915 = vmatprep.subr.mxu0 0.0
    %916 = vmatpush2.msra.mxu0 0.0
    %917 = vmatprep.subr.mxu0 0.0
    %918 = vmatpush2.msra.mxu0 0.0
    %919 = vmatprep.subr.mxu0 0.0
    %920 = vmatpush2.msra.mxu0 0.0
    %921 = vmatprep.subr.mxu0 0.0
    %922 = vmatpush2.msra.mxu0 0.0
    %923 = vmatprep.subr.mxu0 0.0
    %924 = vmatpush2.msra.mxu0 0.0
    %925 = vmatprep.subr.mxu0 0.0
    %926 = vmatpush2.msra.mxu0 0.0
    %927 = vmatprep.subr.mxu0 0.0
    %928 = vmatpush2.msra.mxu0 0.0
    %929 = vmatprep.subr.mxu0 0.0
    %930 = vmatpush2.msra.mxu0 0.0
    %931 = vmatprep.subr.mxu0 0.0
    %932 = vmatpush2.msra.mxu0 0.0
    %933 = vmatprep.subr.mxu0 0.0
    %934 = vmatpush2.msra.mxu0 0.0
    %935 = vmatprep.subr.mxu0 0.0
    %936 = vmatpush2.msra.mxu0 0.0
    %937 = vmatprep.subr.mxu0 0.0
    %938 = vmatpush2.msra.mxu0 0.0
    %939 = vmatprep.subr.mxu0 0.0
    %940 = vmatpush2.msra.mxu0 0.0
    %941 = vmatprep.subr.mxu0 0.0
    %942 = vmatpush2.msra.mxu0 0.0
    %943 = vmatprep.subr.mxu0 0.0
    %944 = vmatpush2.msra.mxu0 0.0
    %945 = vmatprep.subr.mxu0 0.0
    %946 = vmatpush2.msra.mxu0 0.0
    %947 = vmatprep.mubr.f32.mxu0 0.0
    %948 = vmatmul.mubr.f32.gmra.mxu0 %v810
    %v949 = vpop.f32.mrf.mxu0
    %v950 = vadd.f32 0.0, %v949
    %v951 = vpop.f32.mrf.mxu0
    %952 = vdwg.mxu0
    %v954 = vrot.slane %v879, 5
    %v956 = vadd.f32 %v163, %v954
    %v957 = vxor.u32 %v956, 2147483648
    %v958 = vmul.f32 %v957, 1.442695
    %v959 = vpow.pop %v958
    %v960 = vadd.f32 %v959, 1.0
    %v961 = vrcp.pop %v960
    %v962 = vmul.f32 1.0, %v961
    %v964 = vrot.slane %v881, 5
    %v966 = vadd.f32 %v165, %v964
    %v967 = vxor.u32 %v966, 2147483648
    %v968 = vmul.f32 %v967, 1.442695
    %v969 = vpow.pop %v968
    %v970 = vadd.f32 %v969, 1.0
    %v971 = vrcp.pop %v970
    %v972 = vmul.f32 1.0, %v971
    %v973 = vadd.f32 %v950, %v285
    %v975 = vrot.slane %v973, 5
    %v977 = vmul.f32 %v962, %v975
    %v978 = vadd.f32 %v234, %v977
    %v979 = vtanh.pop %v978
    %v981 = vrot.slane %v979, 1
    %v983 = vsub.f32 %v807, %v981
    %v985 = vrot.slane %v983, 7
    %v987 = vmul.f32 %v972, %v985
    %v988 = vadd.f32 %v979, %v987
    %989 = vst [vmem:[#allocation7] sm:$0x8] %v988
    %v991 = vrot.slane %v988, 3
    %993 = vmatprep.subr.mxu0 %v283
    %994 = vmatpush1.msra.mxu0 %v282
    %995 = vmatprep.subr.mxu0 %v280
    %996 = vmatpush1.msra.mxu0 %v279
    %997 = vmatprep.subr.mxu0 %v277
    %998 = vmatpush1.msra.mxu0 %v276
    %999 = vmatprep.subr.mxu0 %v274
    %1000 = vmatpush1.msra.mxu0 %v273
    %1001 = vmatprep.subr.mxu0 %v271
    %1002 = vmatpush1.msra.mxu0 %v270
    %1003 = vmatprep.subr.mxu0 %v268
    %1004 = vmatpush1.msra.mxu0 %v267
    %1005 = vmatprep.subr.mxu0 %v265
    %1006 = vmatpush1.msra.mxu0 %v264
    %1007 = vmatprep.subr.mxu0 %v262
    %1008 = vmatpush1.msra.mxu0 %v261
    %1009 = vmatprep.subr.mxu0 %v259
    %1010 = vmatpush1.msra.mxu0 %v258
    %1011 = vmatprep.subr.mxu0 %v256
    %1012 = vmatpush1.msra.mxu0 %v255
    %1013 = vmatprep.subr.mxu0 %v253
    %1014 = vmatpush1.msra.mxu0 %v252
    %1015 = vmatprep.subr.mxu0 %v250
    %1016 = vmatpush1.msra.mxu0 %v249
    %1017 = vmatprep.subr.mxu0 %v247
    %1018 = vmatpush1.msra.mxu0 %v246
    %1019 = vmatprep.subr.mxu0 %v244
    %1020 = vmatpush1.msra.mxu0 %v243
    %1021 = vmatprep.subr.mxu0 %v241
    %1022 = vmatpush1.msra.mxu0 %v240
    %1023 = vmatprep.subr.mxu0 %v238
    %1024 = vmatpush1.msra.mxu0 %v237
    %1025 = vmatprep.subr.mxu0 0.0
    %1026 = vmatpush2.msra.mxu0 0.0
    %1027 = vmatprep.subr.mxu0 0.0
    %1028 = vmatpush2.msra.mxu0 0.0
    %1029 = vmatprep.subr.mxu0 0.0
    %1030 = vmatpush2.msra.mxu0 0.0
    %1031 = vmatprep.subr.mxu0 0.0
    %1032 = vmatpush2.msra.mxu0 0.0
    %1033 = vmatprep.subr.mxu0 0.0
    %1034 = vmatpush2.msra.mxu0 0.0
    %1035 = vmatprep.subr.mxu0 0.0
    %1036 = vmatpush2.msra.mxu0 0.0
    %1037 = vmatprep.subr.mxu0 0.0
    %1038 = vmatpush2.msra.mxu0 0.0
    %1039 = vmatprep.subr.mxu0 0.0
    %1040 = vmatpush2.msra.mxu0 0.0
    %1041 = vmatprep.subr.mxu0 0.0
    %1042 = vmatpush2.msra.mxu0 0.0
    %1043 = vmatprep.subr.mxu0 0.0
    %1044 = vmatpush2.msra.mxu0 0.0
    %1045 = vmatprep.subr.mxu0 0.0
    %1046 = vmatpush2.msra.mxu0 0.0
    %1047 = vmatprep.subr.mxu0 0.0
    %1048 = vmatpush2.msra.mxu0 0.0
    %1049 = vmatprep.subr.mxu0 0.0
    %1050 = vmatpush2.msra.mxu0 0.0
    %1051 = vmatprep.subr.mxu0 0.0
    %1052 = vmatpush2.msra.mxu0 0.0
    %1053 = vmatprep.subr.mxu0 0.0
    %1054 = vmatpush2.msra.mxu0 0.0
    %1055 = vmatprep.subr.mxu0 0.0
    %1056 = vmatpush2.msra.mxu0 0.0
    %1057 = vmatprep.mubr.f32.mxu0 0.0
    %1058 = vmatmul.mubr.f32.gmra.mxu0 %v991
    %v1059 = vpop.f32.mrf.mxu0
    %v1060 = vadd.f32 0.0, %v1059
    %v1061 = vpop.f32.mrf.mxu0
    %v1062 = vadd.f32 0.0, %v1061
    %1063 = vdwg.mxu0
    %1064 = vmatprep.subr.mxu0 0.0
    %1065 = vmatpush1.msra.mxu0 %v284
    %1066 = vmatprep.subr.mxu0 0.0
    %1067 = vmatpush1.msra.mxu0 %v281
    %1068 = vmatprep.subr.mxu0 0.0
    %1069 = vmatpush1.msra.mxu0 %v278
    %1070 = vmatprep.subr.mxu0 0.0
    %1071 = vmatpush1.msra.mxu0 %v275
    %1072 = vmatprep.subr.mxu0 0.0
    %1073 = vmatpush1.msra.mxu0 %v272
    %1074 = vmatprep.subr.mxu0 0.0
    %1075 = vmatpush1.msra.mxu0 %v269
    %1076 = vmatprep.subr.mxu0 0.0
    %1077 = vmatpush1.msra.mxu0 %v266
    %1078 = vmatprep.subr.mxu0 0.0
    %1079 = vmatpush1.msra.mxu0 %v263
    %1080 = vmatprep.subr.mxu0 0.0
    %1081 = vmatpush1.msra.mxu0 %v260
    %1082 = vmatprep.subr.mxu0 0.0
    %1083 = vmatpush1.msra.mxu0 %v257
    %1084 = vmatprep.subr.mxu0 0.0
    %1085 = vmatpush1.msra.mxu0 %v254
    %1086 = vmatprep.subr.mxu0 0.0
    %1087 = vmatpush1.msra.mxu0 %v251
    %1088 = vmatprep.subr.mxu0 0.0
    %1089 = vmatpush1.msra.mxu0 %v248
    %1090 = vmatprep.subr.mxu0 0.0
    %1091 = vmatpush1.msra.mxu0 %v245
    %1092 = vmatprep.subr.mxu0 0.0
    %1093 = vmatpush1.msra.mxu0 %v242
    %1094 = vmatprep.subr.mxu0 0.0
    %1095 = vmatpush1.msra.mxu0 %v239
    %1096 = vmatprep.subr.mxu0 0.0
    %1097 = vmatpush2.msra.mxu0 0.0
    %1098 = vmatprep.subr.mxu0 0.0
    %1099 = vmatpush2.msra.mxu0 0.0
    %1100 = vmatprep.subr.mxu0 0.0
    %1101 = vmatpush2.msra.mxu0 0.0
    %1102 = vmatprep.subr.mxu0 0.0
    %1103 = vmatpush2.msra.mxu0 0.0
    %1104 = vmatprep.subr.mxu0 0.0
    %1105 = vmatpush2.msra.mxu0 0.0
    %1106 = vmatprep.subr.mxu0 0.0
    %1107 = vmatpush2.msra.mxu0 0.0
    %1108 = vmatprep.subr.mxu0 0.0
    %1109 = vmatpush2.msra.mxu0 0.0
    %1110 = vmatprep.subr.mxu0 0.0
    %1111 = vmatpush2.msra.mxu0 0.0
    %1112 = vmatprep.subr.mxu0 0.0
    %1113 = vmatpush2.msra.mxu0 0.0
    %1114 = vmatprep.subr.mxu0 0.0
    %1115 = vmatpush2.msra.mxu0 0.0
    %1116 = vmatprep.subr.mxu0 0.0
    %1117 = vmatpush2.msra.mxu0 0.0
    %1118 = vmatprep.subr.mxu0 0.0
    %1119 = vmatpush2.msra.mxu0 0.0
    %1120 = vmatprep.subr.mxu0 0.0
    %1121 = vmatpush2.msra.mxu0 0.0
    %1122 = vmatprep.subr.mxu0 0.0
    %1123 = vmatpush2.msra.mxu0 0.0
    %1124 = vmatprep.subr.mxu0 0.0
    %1125 = vmatpush2.msra.mxu0 0.0
    %1126 = vmatprep.subr.mxu0 0.0
    %1127 = vmatpush2.msra.mxu0 0.0
    %1128 = vmatprep.mubr.f32.mxu0 0.0
    %1129 = vmatmul.mubr.f32.gmra.mxu0 %v991
    %v1130 = vpop.f32.mrf.mxu0
    %v1131 = vadd.f32 0.0, %v1130
    %v1132 = vpop.f32.mrf.mxu0
    %1133 = vdwg.mxu0
    %v1135 = vrot.slane %v1060, 4
    %v1137 = vadd.f32 %v163, %v1135
    %v1138 = vxor.u32 %v1137, 2147483648
    %v1139 = vmul.f32 %v1138, 1.442695
    %v1140 = vpow.pop %v1139
    %v1141 = vadd.f32 %v1140, 1.0
    %v1142 = vrcp.pop %v1141
    %v1143 = vmul.f32 1.0, %v1142
    %v1145 = vrot.slane %v1062, 4
    %v1147 = vadd.f32 %v165, %v1145
    %v1148 = vxor.u32 %v1147, 2147483648
    %v1149 = vmul.f32 %v1148, 1.442695
    %v1150 = vpow.pop %v1149
    %v1151 = vadd.f32 %v1150, 1.0
    %v1152 = vrcp.pop %v1151
    %v1153 = vmul.f32 1.0, %v1152
    %v1154 = vadd.f32 %v1131, %v285
    %v1156 = vrot.slane %v1154, 4
    %v1158 = vmul.f32 %v1143, %v1156
    %v1159 = vadd.f32 %v234, %v1158
    %v1160 = vtanh.pop %v1159
    %v1162 = vrot.slane %v1160, 1
    %v1164 = vsub.f32 %v988, %v1162
    %v1166 = vrot.slane %v1164, 7
    %v1168 = vmul.f32 %v1153, %v1166
    %v1169 = vadd.f32 %v1160, %v1168
    %1170 = vst [vmem:[#allocation7] sm:$0x10] %v1169
    %v1172 = vrot.slane %v1169, 4
    %1174 = vmatprep.subr.mxu0 %v283
    %1175 = vmatpush1.msra.mxu0 %v282
    %1176 = vmatprep.subr.mxu0 %v280
    %1177 = vmatpush1.msra.mxu0 %v279
    %1178 = vmatprep.subr.mxu0 %v277
    %1179 = vmatpush1.msra.mxu0 %v276
    %1180 = vmatprep.subr.mxu0 %v274
    %1181 = vmatpush1.msra.mxu0 %v273
    %1182 = vmatprep.subr.mxu0 %v271
    %1183 = vmatpush1.msra.mxu0 %v270
    %1184 = vmatprep.subr.mxu0 %v268
    %1185 = vmatpush1.msra.mxu0 %v267
    %1186 = vmatprep.subr.mxu0 %v265
    %1187 = vmatpush1.msra.mxu0 %v264
    %1188 = vmatprep.subr.mxu0 %v262
    %1189 = vmatpush1.msra.mxu0 %v261
    %1190 = vmatprep.subr.mxu0 %v259
    %1191 = vmatpush1.msra.mxu0 %v258
    %1192 = vmatprep.subr.mxu0 %v256
    %1193 = vmatpush1.msra.mxu0 %v255
    %1194 = vmatprep.subr.mxu0 %v253
    %1195 = vmatpush1.msra.mxu0 %v252
    %1196 = vmatprep.subr.mxu0 %v250
    %1197 = vmatpush1.msra.mxu0 %v249
    %1198 = vmatprep.subr.mxu0 %v247
    %1199 = vmatpush1.msra.mxu0 %v246
    %1200 = vmatprep.subr.mxu0 %v244
    %1201 = vmatpush1.msra.mxu0 %v243
    %1202 = vmatprep.subr.mxu0 %v241
    %1203 = vmatpush1.msra.mxu0 %v240
    %1204 = vmatprep.subr.mxu0 %v238
    %1205 = vmatpush1.msra.mxu0 %v237
    %1206 = vmatprep.subr.mxu0 0.0
    %1207 = vmatpush2.msra.mxu0 0.0
    %1208 = vmatprep.subr.mxu0 0.0
    %1209 = vmatpush2.msra.mxu0 0.0
    %1210 = vmatprep.subr.mxu0 0.0
    %1211 = vmatpush2.msra.mxu0 0.0
    %1212 = vmatprep.subr.mxu0 0.0
    %1213 = vmatpush2.msra.mxu0 0.0
    %1214 = vmatprep.subr.mxu0 0.0
    %1215 = vmatpush2.msra.mxu0 0.0
    %1216 = vmatprep.subr.mxu0 0.0
    %1217 = vmatpush2.msra.mxu0 0.0
    %1218 = vmatprep.subr.mxu0 0.0
    %1219 = vmatpush2.msra.mxu0 0.0
    %1220 = vmatprep.subr.mxu0 0.0
    %1221 = vmatpush2.msra.mxu0 0.0
    %1222 = vmatprep.subr.mxu0 0.0
    %1223 = vmatpush2.msra.mxu0 0.0
    %1224 = vmatprep.subr.mxu0 0.0
    %1225 = vmatpush2.msra.mxu0 0.0
    %1226 = vmatprep.subr.mxu0 0.0
    %1227 = vmatpush2.msra.mxu0 0.0
    %1228 = vmatprep.subr.mxu0 0.0
    %1229 = vmatpush2.msra.mxu0 0.0
    %1230 = vmatprep.subr.mxu0 0.0
    %1231 = vmatpush2.msra.mxu0 0.0
    %1232 = vmatprep.subr.mxu0 0.0
    %1233 = vmatpush2.msra.mxu0 0.0
    %1234 = vmatprep.subr.mxu0 0.0
    %1235 = vmatpush2.msra.mxu0 0.0
    %1236 = vmatprep.subr.mxu0 0.0
    %1237 = vmatpush2.msra.mxu0 0.0
    %1238 = vmatprep.mubr.f32.mxu0 0.0
    %1239 = vmatmul.mubr.f32.gmra.mxu0 %v1172
    %v1240 = vpop.f32.mrf.mxu0
    %v1241 = vadd.f32 0.0, %v1240
    %v1242 = vpop.f32.mrf.mxu0
    %v1243 = vadd.f32 0.0, %v1242
    %1244 = vdwg.mxu0
    %1245 = vmatprep.subr.mxu0 0.0
    %1246 = vmatpush1.msra.mxu0 %v284
    %1247 = vmatprep.subr.mxu0 0.0
    %1248 = vmatpush1.msra.mxu0 %v281
    %1249 = vmatprep.subr.mxu0 0.0
    %1250 = vmatpush1.msra.mxu0 %v278
    %1251 = vmatprep.subr.mxu0 0.0
    %1252 = vmatpush1.msra.mxu0 %v275
    %1253 = vmatprep.subr.mxu0 0.0
    %1254 = vmatpush1.msra.mxu0 %v272
    %1255 = vmatprep.subr.mxu0 0.0
    %1256 = vmatpush1.msra.mxu0 %v269
    %1257 = vmatprep.subr.mxu0 0.0
    %1258 = vmatpush1.msra.mxu0 %v266
    %1259 = vmatprep.subr.mxu0 0.0
    %1260 = vmatpush1.msra.mxu0 %v263
    %1261 = vmatprep.subr.mxu0 0.0
    %1262 = vmatpush1.msra.mxu0 %v260
    %1263 = vmatprep.subr.mxu0 0.0
    %1264 = vmatpush1.msra.mxu0 %v257
    %1265 = vmatprep.subr.mxu0 0.0
    %1266 = vmatpush1.msra.mxu0 %v254
    %1267 = vmatprep.subr.mxu0 0.0
    %1268 = vmatpush1.msra.mxu0 %v251
    %1269 = vmatprep.subr.mxu0 0.0
    %1270 = vmatpush1.msra.mxu0 %v248
    %1271 = vmatprep.subr.mxu0 0.0
    %1272 = vmatpush1.msra.mxu0 %v245
    %1273 = vmatprep.subr.mxu0 0.0
    %1274 = vmatpush1.msra.mxu0 %v242
    %1275 = vmatprep.subr.mxu0 0.0
    %1276 = vmatpush1.msra.mxu0 %v239
    %1277 = vmatprep.subr.mxu0 0.0
    %1278 = vmatpush2.msra.mxu0 0.0
    %1279 = vmatprep.subr.mxu0 0.0
    %1280 = vmatpush2.msra.mxu0 0.0
    %1281 = vmatprep.subr.mxu0 0.0
    %1282 = vmatpush2.msra.mxu0 0.0
    %1283 = vmatprep.subr.mxu0 0.0
    %1284 = vmatpush2.msra.mxu0 0.0
    %1285 = vmatprep.subr.mxu0 0.0
    %1286 = vmatpush2.msra.mxu0 0.0
    %1287 = vmatprep.subr.mxu0 0.0
    %1288 = vmatpush2.msra.mxu0 0.0
    %1289 = vmatprep.subr.mxu0 0.0
    %1290 = vmatpush2.msra.mxu0 0.0
    %1291 = vmatprep.subr.mxu0 0.0
    %1292 = vmatpush2.msra.mxu0 0.0
    %1293 = vmatprep.subr.mxu0 0.0
    %1294 = vmatpush2.msra.mxu0 0.0
    %1295 = vmatprep.subr.mxu0 0.0
    %1296 = vmatpush2.msra.mxu0 0.0
    %1297 = vmatprep.subr.mxu0 0.0
    %1298 = vmatpush2.msra.mxu0 0.0
    %1299 = vmatprep.subr.mxu0 0.0
    %1300 = vmatpush2.msra.mxu0 0.0
    %1301 = vmatprep.subr.mxu0 0.0
    %1302 = vmatpush2.msra.mxu0 0.0
    %1303 = vmatprep.subr.mxu0 0.0
    %1304 = vmatpush2.msra.mxu0 0.0
    %1305 = vmatprep.subr.mxu0 0.0
    %1306 = vmatpush2.msra.mxu0 0.0
    %1307 = vmatprep.subr.mxu0 0.0
    %1308 = vmatpush2.msra.mxu0 0.0
    %1309 = vmatprep.mubr.f32.mxu0 0.0
    %1310 = vmatmul.mubr.f32.gmra.mxu0 %v1172
    %v1311 = vpop.f32.mrf.mxu0
    %v1312 = vadd.f32 0.0, %v1311
    %v1313 = vpop.f32.mrf.mxu0
    %1314 = vdwg.mxu0
    %v1316 = vrot.slane %v1241, 3
    %v1318 = vadd.f32 %v163, %v1316
    %v1319 = vxor.u32 %v1318, 2147483648
    %v1320 = vmul.f32 %v1319, 1.442695
    %v1321 = vpow.pop %v1320
    %v1322 = vadd.f32 %v1321, 1.0
    %v1323 = vrcp.pop %v1322
    %v1324 = vmul.f32 1.0, %v1323
    %v1326 = vrot.slane %v1243, 3
    %v1328 = vadd.f32 %v165, %v1326
    %v1329 = vxor.u32 %v1328, 2147483648
    %v1330 = vmul.f32 %v1329, 1.442695
    %v1331 = vpow.pop %v1330
    %v1332 = vadd.f32 %v1331, 1.0
    %v1333 = vrcp.pop %v1332
    %v1334 = vmul.f32 1.0, %v1333
    %v1335 = vadd.f32 %v1312, %v285
    %v1337 = vrot.slane %v1335, 3
    %v1339 = vmul.f32 %v1324, %v1337
    %v1340 = vadd.f32 %v234, %v1339
    %v1341 = vtanh.pop %v1340
    %v1343 = vrot.slane %v1341, 1
    %v1345 = vsub.f32 %v1169, %v1343
    %v1347 = vrot.slane %v1345, 7
    %v1349 = vmul.f32 %v1334, %v1347
    %v1350 = vadd.f32 %v1341, %v1349
    %1351 = vst [vmem:[#allocation7] sm:$0x20] %v1350
    %v1353 = vrot.slane %v1350, 5
    %1355 = vmatprep.subr.mxu0 %v283
    %1356 = vmatpush1.msra.mxu0 %v282
    %1357 = vmatprep.subr.mxu0 %v280
    %1358 = vmatpush1.msra.mxu0 %v279
    %1359 = vmatprep.subr.mxu0 %v277
    %1360 = vmatpush1.msra.mxu0 %v276
    %1361 = vmatprep.subr.mxu0 %v274
    %1362 = vmatpush1.msra.mxu0 %v273
    %1363 = vmatprep.subr.mxu0 %v271
    %1364 = vmatpush1.msra.mxu0 %v270
    %1365 = vmatprep.subr.mxu0 %v268
    %1366 = vmatpush1.msra.mxu0 %v267
    %1367 = vmatprep.subr.mxu0 %v265
    %1368 = vmatpush1.msra.mxu0 %v264
    %1369 = vmatprep.subr.mxu0 %v262
    %1370 = vmatpush1.msra.mxu0 %v261
    %1371 = vmatprep.subr.mxu0 %v259
    %1372 = vmatpush1.msra.mxu0 %v258
    %1373 = vmatprep.subr.mxu0 %v256
    %1374 = vmatpush1.msra.mxu0 %v255
    %1375 = vmatprep.subr.mxu0 %v253
    %1376 = vmatpush1.msra.mxu0 %v252
    %1377 = vmatprep.subr.mxu0 %v250
    %1378 = vmatpush1.msra.mxu0 %v249
    %1379 = vmatprep.subr.mxu0 %v247
    %1380 = vmatpush1.msra.mxu0 %v246
    %1381 = vmatprep.subr.mxu0 %v244
    %1382 = vmatpush1.msra.mxu0 %v243
    %1383 = vmatprep.subr.mxu0 %v241
    %1384 = vmatpush1.msra.mxu0 %v240
    %1385 = vmatprep.subr.mxu0 %v238
    %1386 = vmatpush1.msra.mxu0 %v237
    %1387 = vmatprep.subr.mxu0 0.0
    %1388 = vmatpush2.msra.mxu0 0.0
    %1389 = vmatprep.subr.mxu0 0.0
    %1390 = vmatpush2.msra.mxu0 0.0
    %1391 = vmatprep.subr.mxu0 0.0
    %1392 = vmatpush2.msra.mxu0 0.0
    %1393 = vmatprep.subr.mxu0 0.0
    %1394 = vmatpush2.msra.mxu0 0.0
    %1395 = vmatprep.subr.mxu0 0.0
    %1396 = vmatpush2.msra.mxu0 0.0
    %1397 = vmatprep.subr.mxu0 0.0
    %1398 = vmatpush2.msra.mxu0 0.0
    %1399 = vmatprep.subr.mxu0 0.0
    %1400 = vmatpush2.msra.mxu0 0.0
    %1401 = vmatprep.subr.mxu0 0.0
    %1402 = vmatpush2.msra.mxu0 0.0
    %1403 = vmatprep.subr.mxu0 0.0
    %1404 = vmatpush2.msra.mxu0 0.0
    %1405 = vmatprep.subr.mxu0 0.0
    %1406 = vmatpush2.msra.mxu0 0.0
    %1407 = vmatprep.subr.mxu0 0.0
    %1408 = vmatpush2.msra.mxu0 0.0
    %1409 = vmatprep.subr.mxu0 0.0
    %1410 = vmatpush2.msra.mxu0 0.0
    %1411 = vmatprep.subr.mxu0 0.0
    %1412 = vmatpush2.msra.mxu0 0.0
    %1413 = vmatprep.subr.mxu0 0.0
    %1414 = vmatpush2.msra.mxu0 0.0
    %1415 = vmatprep.subr.mxu0 0.0
    %1416 = vmatpush2.msra.mxu0 0.0
    %1417 = vmatprep.subr.mxu0 0.0
    %1418 = vmatpush2.msra.mxu0 0.0
    %1419 = vmatprep.mubr.f32.mxu0 0.0
    %1420 = vmatmul.mubr.f32.gmra.mxu0 %v1353
    %v1421 = vpop.f32.mrf.mxu0
    %v1422 = vadd.f32 0.0, %v1421
    %v1423 = vpop.f32.mrf.mxu0
    %v1424 = vadd.f32 0.0, %v1423
    %1425 = vdwg.mxu0
    %1426 = vmatprep.subr.mxu0 0.0
    %1427 = vmatpush1.msra.mxu0 %v284
    %1428 = vmatprep.subr.mxu0 0.0
    %1429 = vmatpush1.msra.mxu0 %v281
    %1430 = vmatprep.subr.mxu0 0.0
    %1431 = vmatpush1.msra.mxu0 %v278
    %1432 = vmatprep.subr.mxu0 0.0
    %1433 = vmatpush1.msra.mxu0 %v275
    %1434 = vmatprep.subr.mxu0 0.0
    %1435 = vmatpush1.msra.mxu0 %v272
    %1436 = vmatprep.subr.mxu0 0.0
    %1437 = vmatpush1.msra.mxu0 %v269
    %1438 = vmatprep.subr.mxu0 0.0
    %1439 = vmatpush1.msra.mxu0 %v266
    %1440 = vmatprep.subr.mxu0 0.0
    %1441 = vmatpush1.msra.mxu0 %v263
    %1442 = vmatprep.subr.mxu0 0.0
    %1443 = vmatpush1.msra.mxu0 %v260
    %1444 = vmatprep.subr.mxu0 0.0
    %1445 = vmatpush1.msra.mxu0 %v257
    %1446 = vmatprep.subr.mxu0 0.0
    %1447 = vmatpush1.msra.mxu0 %v254
    %1448 = vmatprep.subr.mxu0 0.0
    %1449 = vmatpush1.msra.mxu0 %v251
    %1450 = vmatprep.subr.mxu0 0.0
    %1451 = vmatpush1.msra.mxu0 %v248
    %1452 = vmatprep.subr.mxu0 0.0
    %1453 = vmatpush1.msra.mxu0 %v245
    %1454 = vmatprep.subr.mxu0 0.0
    %1455 = vmatpush1.msra.mxu0 %v242
    %1456 = vmatprep.subr.mxu0 0.0
    %1457 = vmatpush1.msra.mxu0 %v239
    %1458 = vmatprep.subr.mxu0 0.0
    %1459 = vmatpush2.msra.mxu0 0.0
    %1460 = vmatprep.subr.mxu0 0.0
    %1461 = vmatpush2.msra.mxu0 0.0
    %1462 = vmatprep.subr.mxu0 0.0
    %1463 = vmatpush2.msra.mxu0 0.0
    %1464 = vmatprep.subr.mxu0 0.0
    %1465 = vmatpush2.msra.mxu0 0.0
    %1466 = vmatprep.subr.mxu0 0.0
    %1467 = vmatpush2.msra.mxu0 0.0
    %1468 = vmatprep.subr.mxu0 0.0
    %1469 = vmatpush2.msra.mxu0 0.0
    %1470 = vmatprep.subr.mxu0 0.0
    %1471 = vmatpush2.msra.mxu0 0.0
    %1472 = vmatprep.subr.mxu0 0.0
    %1473 = vmatpush2.msra.mxu0 0.0
    %1474 = vmatprep.subr.mxu0 0.0
    %1475 = vmatpush2.msra.mxu0 0.0
    %1476 = vmatprep.subr.mxu0 0.0
    %1477 = vmatpush2.msra.mxu0 0.0
    %1478 = vmatprep.subr.mxu0 0.0
    %1479 = vmatpush2.msra.mxu0 0.0
    %1480 = vmatprep.subr.mxu0 0.0
    %1481 = vmatpush2.msra.mxu0 0.0
    %1482 = vmatprep.subr.mxu0 0.0
    %1483 = vmatpush2.msra.mxu0 0.0
    %1484 = vmatprep.subr.mxu0 0.0
    %1485 = vmatpush2.msra.mxu0 0.0
    %1486 = vmatprep.subr.mxu0 0.0
    %1487 = vmatpush2.msra.mxu0 0.0
    %1488 = vmatprep.subr.mxu0 0.0
    %1489 = vmatpush2.msra.mxu0 0.0
    %1490 = vmatprep.mubr.f32.mxu0 0.0
    %1491 = vmatmul.mubr.f32.gmra.mxu0 %v1353
    %v1492 = vpop.f32.mrf.mxu0
    %v1493 = vadd.f32 0.0, %v1492
    %v1494 = vpop.f32.mrf.mxu0
    %1495 = vdwg.mxu0
    %v1497 = vrot.slane %v1422, 2
    %v1499 = vadd.f32 %v163, %v1497
    %v1500 = vxor.u32 %v1499, 2147483648
    %v1501 = vmul.f32 %v1500, 1.442695
    %v1502 = vpow.pop %v1501
    %v1503 = vadd.f32 %v1502, 1.0
    %v1504 = vrcp.pop %v1503
    %v1505 = vmul.f32 1.0, %v1504
    %v1507 = vrot.slane %v1424, 2
    %v1509 = vadd.f32 %v165, %v1507
    %v1510 = vxor.u32 %v1509, 2147483648
    %v1511 = vmul.f32 %v1510, 1.442695
    %v1512 = vpow.pop %v1511
    %v1513 = vadd.f32 %v1512, 1.0
    %v1514 = vrcp.pop %v1513
    %v1515 = vmul.f32 1.0, %v1514
    %v1516 = vadd.f32 %v1493, %v285
    %v1518 = vrot.slane %v1516, 2
    %v1520 = vmul.f32 %v1505, %v1518
    %v1521 = vadd.f32 %v234, %v1520
    %v1522 = vtanh.pop %v1521
    %v1524 = vrot.slane %v1522, 1
    %v1526 = vsub.f32 %v1350, %v1524
    %v1528 = vrot.slane %v1526, 7
    %v1530 = vmul.f32 %v1515, %v1528
    %v1531 = vadd.f32 %v1522, %v1530
    %1532 = vst [vmem:[#allocation7] sm:$0x40] %v1531
    %v1534 = vrot.slane %v1531, 6
    %1536 = vmatprep.subr.mxu0 %v283
    %1537 = vmatpush1.msra.mxu0 %v282
    %1538 = vmatprep.subr.mxu0 %v280
    %1539 = vmatpush1.msra.mxu0 %v279
    %1540 = vmatprep.subr.mxu0 %v277
    %1541 = vmatpush1.msra.mxu0 %v276
    %1542 = vmatprep.subr.mxu0 %v274
    %1543 = vmatpush1.msra.mxu0 %v273
    %1544 = vmatprep.subr.mxu0 %v271
    %1545 = vmatpush1.msra.mxu0 %v270
    %1546 = vmatprep.subr.mxu0 %v268
    %1547 = vmatpush1.msra.mxu0 %v267
    %1548 = vmatprep.subr.mxu0 %v265
    %1549 = vmatpush1.msra.mxu0 %v264
    %1550 = vmatprep.subr.mxu0 %v262
    %1551 = vmatpush1.msra.mxu0 %v261
    %1552 = vmatprep.subr.mxu0 %v259
    %1553 = vmatpush1.msra.mxu0 %v258
    %1554 = vmatprep.subr.mxu0 %v256
    %1555 = vmatpush1.msra.mxu0 %v255
    %1556 = vmatprep.subr.mxu0 %v253
    %1557 = vmatpush1.msra.mxu0 %v252
    %1558 = vmatprep.subr.mxu0 %v250
    %1559 = vmatpush1.msra.mxu0 %v249
    %1560 = vmatprep.subr.mxu0 %v247
    %1561 = vmatpush1.msra.mxu0 %v246
    %1562 = vmatprep.subr.mxu0 %v244
    %1563 = vmatpush1.msra.mxu0 %v243
    %1564 = vmatprep.subr.mxu0 %v241
    %1565 = vmatpush1.msra.mxu0 %v240
    %1566 = vmatprep.subr.mxu0 %v238
    %1567 = vmatpush1.msra.mxu0 %v237
    %1568 = vmatprep.subr.mxu0 0.0
    %1569 = vmatpush2.msra.mxu0 0.0
    %1570 = vmatprep.subr.mxu0 0.0
    %1571 = vmatpush2.msra.mxu0 0.0
    %1572 = vmatprep.subr.mxu0 0.0
    %1573 = vmatpush2.msra.mxu0 0.0
    %1574 = vmatprep.subr.mxu0 0.0
    %1575 = vmatpush2.msra.mxu0 0.0
    %1576 = vmatprep.subr.mxu0 0.0
    %1577 = vmatpush2.msra.mxu0 0.0
    %1578 = vmatprep.subr.mxu0 0.0
    %1579 = vmatpush2.msra.mxu0 0.0
    %1580 = vmatprep.subr.mxu0 0.0
    %1581 = vmatpush2.msra.mxu0 0.0
    %1582 = vmatprep.subr.mxu0 0.0
    %1583 = vmatpush2.msra.mxu0 0.0
    %1584 = vmatprep.subr.mxu0 0.0
    %1585 = vmatpush2.msra.mxu0 0.0
    %1586 = vmatprep.subr.mxu0 0.0
    %1587 = vmatpush2.msra.mxu0 0.0
    %1588 = vmatprep.subr.mxu0 0.0
    %1589 = vmatpush2.msra.mxu0 0.0
    %1590 = vmatprep.subr.mxu0 0.0
    %1591 = vmatpush2.msra.mxu0 0.0
    %1592 = vmatprep.subr.mxu0 0.0
    %1593 = vmatpush2.msra.mxu0 0.0
    %1594 = vmatprep.subr.mxu0 0.0
    %1595 = vmatpush2.msra.mxu0 0.0
    %1596 = vmatprep.subr.mxu0 0.0
    %1597 = vmatpush2.msra.mxu0 0.0
    %1598 = vmatprep.subr.mxu0 0.0
    %1599 = vmatpush2.msra.mxu0 0.0
    %1600 = vmatprep.mubr.f32.mxu0 0.0
    %1601 = vmatmul.mubr.f32.gmra.mxu0 %v1534
    %v1602 = vpop.f32.mrf.mxu0
    %v1603 = vadd.f32 0.0, %v1602
    %v1604 = vpop.f32.mrf.mxu0
    %v1605 = vadd.f32 0.0, %v1604
    %1606 = vdwg.mxu0
    %1607 = vmatprep.subr.mxu0 0.0
    %1608 = vmatpush1.msra.mxu0 %v284
    %1609 = vmatprep.subr.mxu0 0.0
    %1610 = vmatpush1.msra.mxu0 %v281
    %1611 = vmatprep.subr.mxu0 0.0
    %1612 = vmatpush1.msra.mxu0 %v278
    %1613 = vmatprep.subr.mxu0 0.0
    %1614 = vmatpush1.msra.mxu0 %v275
    %1615 = vmatprep.subr.mxu0 0.0
    %1616 = vmatpush1.msra.mxu0 %v272
    %1617 = vmatprep.subr.mxu0 0.0
    %1618 = vmatpush1.msra.mxu0 %v269
    %1619 = vmatprep.subr.mxu0 0.0
    %1620 = vmatpush1.msra.mxu0 %v266
    %1621 = vmatprep.subr.mxu0 0.0
    %1622 = vmatpush1.msra.mxu0 %v263
    %1623 = vmatprep.subr.mxu0 0.0
    %1624 = vmatpush1.msra.mxu0 %v260
    %1625 = vmatprep.subr.mxu0 0.0
    %1626 = vmatpush1.msra.mxu0 %v257
    %1627 = vmatprep.subr.mxu0 0.0
    %1628 = vmatpush1.msra.mxu0 %v254
    %1629 = vmatprep.subr.mxu0 0.0
    %1630 = vmatpush1.msra.mxu0 %v251
    %1631 = vmatprep.subr.mxu0 0.0
    %1632 = vmatpush1.msra.mxu0 %v248
    %1633 = vmatprep.subr.mxu0 0.0
    %1634 = vmatpush1.msra.mxu0 %v245
    %1635 = vmatprep.subr.mxu0 0.0
    %1636 = vmatpush1.msra.mxu0 %v242
    %1637 = vmatprep.subr.mxu0 0.0
    %1638 = vmatpush1.msra.mxu0 %v239
    %1639 = vmatprep.subr.mxu0 0.0
    %1640 = vmatpush2.msra.mxu0 0.0
    %1641 = vmatprep.subr.mxu0 0.0
    %1642 = vmatpush2.msra.mxu0 0.0
    %1643 = vmatprep.subr.mxu0 0.0
    %1644 = vmatpush2.msra.mxu0 0.0
    %1645 = vmatprep.subr.mxu0 0.0
    %1646 = vmatpush2.msra.mxu0 0.0
    %1647 = vmatprep.subr.mxu0 0.0
    %1648 = vmatpush2.msra.mxu0 0.0
    %1649 = vmatprep.subr.mxu0 0.0
    %1650 = vmatpush2.msra.mxu0 0.0
    %1651 = vmatprep.subr.mxu0 0.0
    %1652 = vmatpush2.msra.mxu0 0.0
    %1653 = vmatprep.subr.mxu0 0.0
    %1654 = vmatpush2.msra.mxu0 0.0
    %1655 = vmatprep.subr.mxu0 0.0
    %1656 = vmatpush2.msra.mxu0 0.0
    %1657 = vmatprep.subr.mxu0 0.0
    %1658 = vmatpush2.msra.mxu0 0.0
    %1659 = vmatprep.subr.mxu0 0.0
    %1660 = vmatpush2.msra.mxu0 0.0
    %1661 = vmatprep.subr.mxu0 0.0
    %1662 = vmatpush2.msra.mxu0 0.0
    %1663 = vmatprep.subr.mxu0 0.0
    %1664 = vmatpush2.msra.mxu0 0.0
    %1665 = vmatprep.subr.mxu0 0.0
    %1666 = vmatpush2.msra.mxu0 0.0
    %1667 = vmatprep.subr.mxu0 0.0
    %1668 = vmatpush2.msra.mxu0 0.0
    %1669 = vmatprep.subr.mxu0 0.0
    %1670 = vmatpush2.msra.mxu0 0.0
    %1671 = vmatprep.mubr.f32.mxu0 0.0
    %1672 = vmatmul.mubr.f32.gmra.mxu0 %v1534
    %v1673 = vpop.f32.mrf.mxu0
    %v1674 = vadd.f32 0.0, %v1673
    %v1675 = vpop.f32.mrf.mxu0
    %1676 = vdwg.mxu0
    %v1678 = vrot.slane %v1603, 1
    %v1680 = vadd.f32 %v163, %v1678
    %v1681 = vxor.u32 %v1680, 2147483648
    %v1682 = vmul.f32 %v1681, 1.442695
    %v1683 = vpow.pop %v1682
    %v1684 = vadd.f32 %v1683, 1.0
    %v1685 = vrcp.pop %v1684
    %v1686 = vmul.f32 1.0, %v1685
    %v1688 = vrot.slane %v1605, 1
    %v1690 = vadd.f32 %v165, %v1688
    %v1691 = vxor.u32 %v1690, 2147483648
    %v1692 = vmul.f32 %v1691, 1.442695
    %v1693 = vpow.pop %v1692
    %v1694 = vadd.f32 %v1693, 1.0
    %v1695 = vrcp.pop %v1694
    %v1696 = vmul.f32 1.0, %v1695
    %v1697 = vadd.f32 %v1674, %v285
    %v1699 = vrot.slane %v1697, 1
    %v1701 = vmul.f32 %v1686, %v1699
    %v1702 = vadd.f32 %v234, %v1701
    %v1703 = vtanh.pop %v1702
    %v1705 = vrot.slane %v1703, 1
    %v1707 = vsub.f32 %v1531, %v1705
    %v1709 = vrot.slane %v1707, 7
    %v1711 = vmul.f32 %v1696, %v1709
    %v1712 = vadd.f32 %v1703, %v1711
    %1713 = vst [vmem:[#allocation7] sm:$0x80] %v1712
    %1714 = vst [vmem:[#allocation8 - $0x7] sm:$0x80] %v1712
    // Predicated region
    $region30: #{tpu_custom_call.1} parent=1 // pred_check
      _
    $region31: #{tpu_custom_call.1} parent=1 // pred_check_branch
      %1716 = sbr.rel (0) target = $region33
    $region32: #{tpu_custom_call.1} parent=1 // pred_region
      %s1718 = ssub.s32 128, 128
      %1719 = vsyncadd [#allocation4], %s1718
      %s1721 = sshll.u32 [#allocation7], 4
      %s1722 = int_to_ptr.vmem [resolvable:$true] %s1721
      %1724 = dma.vmem_to_hbm [thread:$0]  %s1722, 128, %s5, [#allocation4]
    $region33: #{tpu_custom_call.1} parent=1 // pred_fallthru
      _
    // Predicated region
    $region34: #{tpu_custom_call.1} parent=1 // pred_check
      _
    $region35: #{tpu_custom_call.1} parent=1 // pred_check_branch
      %1726 = sbr.rel (0) target = $region37
    $region36: #{tpu_custom_call.1} parent=1 // pred_region
      %s1728 = ssub.s32 16, 16
      %1729 = vsyncadd [#allocation9], %s1728
      %s1731 = sshll.u32 [#allocation8], 4
      %s1732 = int_to_ptr.vmem [resolvable:$true] %s1731
      %1734 = dma.vmem_to_hbm [thread:$0]  %s1732, 16, %s6, [#allocation9]
    $region37: #{tpu_custom_call.1} parent=1 // pred_fallthru
      _
    // Predicated region
    $region38: #{tpu_custom_call.1} parent=1 // pred_check
      _
    $region39: #{tpu_custom_call.1} parent=1 // pred_check_branch
      %1736 = sbr.rel (0) target = $region41
    $region40: #{tpu_custom_call.1} parent=1 // pred_region
      %1737 = dma.done [#allocation4], 128
    $region41: #{tpu_custom_call.1} parent=1 // pred_fallthru
      _
    // Predicated region
    $region42: #{tpu_custom_call.1} parent=1 // pred_check
      _
    $region43: #{tpu_custom_call.1} parent=1 // pred_check_branch
      %1739 = sbr.rel (0) target = $region45
    $region44: #{tpu_custom_call.1} parent=1 // pred_region
      %1740 = dma.done [#allocation9], 16
    $region45: #{tpu_custom_call.1} parent=1 // pred_fallthru
      _
    %1741 = vsyncpa [#allocation3], 1
    %1742 = vsyncpa [#allocation6], 1
    %1743 = vsyncpa [#allocation4], 1
    %1744 = vsyncpa [#allocation9], 1

</llo_original>
